<compile_context>
chip_gen: v5e
topology: v5e:2x2
jax: 0.10.0
libtpu: 0.0.40
codegen_flags: <defaults>
</compile_context>

<pallas_src>
import numpy as np

import jax
import jax.numpy as jnp
from jax.experimental import pallas as pl
from jax.experimental.pallas import tpu as pltpu


# ---------------------------------------------------------------------------
# Kernel
# ---------------------------------------------------------------------------
def _make_fused_block_kernel(B, H, WC):
    M = B * H  # rows per grid step (B whole images stacked along H)

    def kernel(x_ref, w1_ref, b1_ref, w2_ref, b2_ref, o_ref, xpad_ref):
        x = x_ref[...]                                    # (M, WC) f32
        zero_row = jnp.zeros((1, WC), jnp.float32)

        # Per-row height index within its image; used to zero the rows of the
        # shifted taps that fall outside an image (height halo) and to stop
        # taps leaking across image boundaries inside the stacked block.
        h = jax.lax.broadcasted_iota(jnp.int32, (M, WC), 0) % H
        top = h == 0
        bot = h == (H - 1)

        def lhs(a):
            # `a` is resident in xpad_ref[1:M+1].  Fold the three kh taps into
            # the contraction (lane) dimension: [a[h-1] | a[h] | a[h+1]], with
            # zeros at image top/bottom -> one K = 3*WC bf16 MXU matmul.
            up = jnp.where(top, 0.0, xpad_ref[0:M, :])        # a[h-1]
            dn = jnp.where(bot, 0.0, xpad_ref[2:M + 2, :])    # a[h+1]
            return jnp.concatenate(
                [up.astype(jnp.bfloat16),
                 a.astype(jnp.bfloat16),
                 dn.astype(jnp.bfloat16)], axis=-1)            # (M, 3*WC) bf16

        # Height-halo scratch (width padding + kw taps are baked into the
        # Toeplitz weight).  Zero rows are rewritten every step on purpose:
        # with the "parallel" batch axis, program_id==0 gating would leave the
        # second v7x TensorCore's scratch uninitialized.
        xpad_ref[0:1, :] = zero_row
        xpad_ref[M + 1:M + 2, :] = zero_row
        xpad_ref[1:M + 1, :] = x

        # conv1 + folded BN1 + ReLU : single (M,3WC)x(3WC,WC) dot, f32 acc.
        mid = jnp.maximum(
            jnp.dot(lhs(x), w1_ref[...], preferred_element_type=jnp.float32)
            + b1_ref[...], 0.0)

        # conv2 + folded BN2 + residual (f32 x) + ReLU.  `mid` never leaves
        # VMEM; the same halo scratch is reused.
        xpad_ref[1:M + 1, :] = mid
        out = jnp.maximum(
            jnp.dot(lhs(mid), w2_ref[...], preferred_element_type=jnp.float32)
            + b2_ref[...] + x, 0.0)

        o_ref[...] = out.astype(o_ref.dtype)

    return kernel


# ---------------------------------------------------------------------------
# Parameter preparation (done once at load time, not per forward)
# ---------------------------------------------------------------------------
def _bn_fold(gamma, beta, mean, var, eps=1e-5):
    scale = gamma / jnp.sqrt(var + eps)
    bias = beta - mean * scale
    return scale, bias


def _toeplitz_weight(w_oihw, scale, W):
    """OIHW 3x3 conv weight (per-Cout BN scale folded in) ->
    (3*W*Cin, W*Cout) bf16 block-Toeplitz matrix.  The kh taps are stacked
    along the contraction dim; kw taps and width zero-padding are baked in."""
    w = jnp.transpose(w_oihw, (2, 3, 1, 0)).astype(jnp.float32)  # (3,3,Cin,Cout)
    w = w * scale[None, None, None, :]
    Cin, Cout = w.shape[2], w.shape[3]
    kw = np.arange(3)[:, None, None]
    wi = np.arange(W)[None, :, None]
    wo = np.arange(W)[None, None, :]
    # S[kw, w_in, w_out] = 1 iff w_in == w_out + kw - 1 (OOB taps -> implicit 0)
    S = jnp.asarray((wi == wo + kw - 1).astype(np.float32))       # (3, W, W)
    t = jnp.einsum('xiw,hxco->hicwo', S, w)                       # (3,W,Cin,W,Cout)
    return t.reshape(3 * W * Cin, W * Cout).astype(jnp.bfloat16)


def prepare_block_params(params, W, eps=1e-5):
    """Fold BN into conv weights/biases and build bf16 Toeplitz matmul weights."""
    s1, b1 = _bn_fold(params["bn1_gamma"], params["bn1_beta"],
                      params["bn1_mean"], params["bn1_var"], eps)
    s2, b2 = _bn_fold(params["bn2_gamma"], params["bn2_beta"],
                      params["bn2_mean"], params["bn2_var"], eps)
    C1 = params["conv1_w"].shape[0]
    C2 = params["conv2_w"].shape[0]
    return {
        "w1": _toeplitz_weight(params["conv1_w"], s1, W),          # bf16
        "b1": jnp.tile(b1.astype(jnp.float32), W).reshape(1, W * C1),
        "w2": _toeplitz_weight(params["conv2_w"], s2, W),          # bf16
        "b2": jnp.tile(b2.astype(jnp.float32), W).reshape(1, W * C2),
    }


# ---------------------------------------------------------------------------
# Forward
# ---------------------------------------------------------------------------
def _pick_images_per_step(n_images, H, max_rows=256):
    """Largest B with: B | n_images, B*H <= max_rows (M=256 fills the v6e/v7x
    MXU), and grid length >= 2 when the batch allows it (v7x: 2 TensorCores)."""
    best = 1
    for b in range(1, n_images + 1):
        if n_images % b:
            continue
        if b * H > max_rows:
            break
        if n_images // b >= 2 or n_images == b == 1:
            best = b
    return best


def basic_block_forward_flat(x_flat, prep, H, images_per_step=None):
    """Fused block on flat (N*H, W*C) activations (lane-dense layout)."""
    NH, WC = x_flat.shape
    N = NH // H
    assert NH == N * H
    B = images_per_step if images_per_step is not None else _pick_images_per_step(N, H)
    assert N % B == 0
    M = B * H
    KC = 3 * WC
    assert WC % 128 == 0 and M % 8 == 0, "lane/sublane alignment"

    kernel = _make_fused_block_kernel(B, H, WC)

    return pl.pallas_call(
        kernel,
        out_shape=jax.ShapeDtypeStruct((NH, WC), jnp.float32),
        grid_spec=pltpu.PrefetchScalarGridSpec(
            num_scalar_prefetch=0,
            grid=(N // B,),
            in_specs=[
                pl.BlockSpec((M, WC), lambda i: (i, 0)),    # x: B images / step
                pl.BlockSpec((KC, WC), lambda i: (0, 0)),   # w1 (bf16 Toeplitz)
                pl.BlockSpec((1, WC), lambda i: (0, 0)),    # b1 (tiled, f32)
                pl.BlockSpec((KC, WC), lambda i: (0, 0)),   # w2 (bf16 Toeplitz)
                pl.BlockSpec((1, WC), lambda i: (0, 0)),    # b2 (tiled, f32)
            ],
            out_specs=pl.BlockSpec((M, WC), lambda i: (i, 0)),
            scratch_shapes=[
                pltpu.VMEM((M + 2, WC), jnp.float32),        # height-halo slab
            ],
        ),
        compiler_params=pltpu.CompilerParams(
            dimension_semantics=("parallel",)),
    )(x_flat, prep["w1"], prep["b1"], prep["w2"], prep["b2"])


def basic_block_forward(x_nchw, prep):
    """Spec-compliant NCHW in / NCHW out wrapper around the flat kernel.
    TODO(synk): in a full ResNet keep activations in the flat (N*H, W*C)
    layout between blocks so these relayout transposes (full HBM re-read /
    re-write of the activation) disappear."""
    N, C, H, W = x_nchw.shape
    x_flat = jnp.transpose(x_nchw, (0, 2, 3, 1)).reshape(N * H, W * C)
    out_flat = basic_block_forward_flat(x_flat, prep, H)
    return jnp.transpose(out_flat.reshape(N, H, W, C), (0, 3, 1, 2))


# ---------------------------------------------------------------------------
# References (for verification)
# ---------------------------------------------------------------------------
def _ref_block_f32(x_nchw, params, eps=1e-5):
    """Pure f32 reference with the exact PyTorch-module semantics (eval BN)."""
    def conv(x, w):
        return jax.lax.conv_general_dilated(
            x, w, window_strides=(1, 1), padding=((1, 1), (1, 1)),
            dimension_numbers=("NCHW", "OIHW", "NCHW"))

    def bn(x, g, b, m, v):
        g, b, m, v = [a.reshape(1, -1, 1, 1) for a in (g, b, m, v)]
        return g * (x - m) / jnp.sqrt(v + eps) + b

    out = conv(x_nchw, params["conv1_w"])
    out = bn(out, params["bn1_gamma"], params["bn1_beta"],
             params["bn1_mean"], params["bn1_var"])
    out = jnp.maximum(out, 0.0)
    out = conv(out, params["conv2_w"])
    out = bn(out, params["bn2_gamma"], params["bn2_beta"],
             params["bn2_mean"], params["bn2_var"])
    return jnp.maximum(out + x_nchw, 0.0)


def _ref_block_bf16_matched(x_nchw, params, eps=1e-5):
    """Reference using the kernel's precision choices (BN folded into weights,
    bf16 matmul operands, f32 accumulation/epilogue, f32 residual)."""
    def conv(xv, wv):
        return jax.lax.conv_general_dilated(
            xv.astype(jnp.bfloat16), wv.astype(jnp.bfloat16),
            window_strides=(1, 1), padding=((1, 1), (1, 1)),
            dimension_numbers=("NCHW", "OIHW", "NCHW"),
            preferred_element_type=jnp.float32)

    s1, b1 = _bn_fold(params["bn1_gamma"], params["bn1_beta"],
                      params["bn1_mean"], params["bn1_var"], eps)
    s2, b2 = _bn_fold(params["bn2_gamma"], params["bn2_beta"],
                      params["bn2_mean"], params["bn2_var"], eps)
    w1 = params["conv1_w"] * s1[:, None, None, None]
    w2 = params["conv2_w"] * s2[:, None, None, None]
    mid = jnp.maximum(conv(x_nchw, w1) + b1.reshape(1, -1, 1, 1), 0.0)
    return jnp.maximum(conv(mid, w2) + b2.reshape(1, -1, 1, 1) + x_nchw, 0.0)


if __name__ == "__main__":
    # W*C = 128 (lane-dense); B=8 images/step -> M = B*H = 128 MXU rows,
    # grid = (2,) so both v7x TensorCores get work.
    N, C, H, W = 16, 8, 16, 16
    planes = C

    key = jax.random.PRNGKey(0)
    ks = jax.random.split(key, 11)

    params = {
        "conv1_w": 0.1 * jax.random.normal(ks[0], (planes, C, 3, 3), jnp.float32),
        "conv2_w": 0.1 * jax.random.normal(ks[1], (planes, planes, 3, 3), jnp.float32),
        "bn1_gamma": 1.0 + 0.1 * jax.random.normal(ks[2], (planes,), jnp.float32),
        "bn1_beta": 0.1 * jax.random.normal(ks[3], (planes,), jnp.float32),
        "bn1_mean": 0.1 * jax.random.normal(ks[4], (planes,), jnp.float32),
        "bn1_var": jnp.abs(jax.random.normal(ks[5], (planes,), jnp.float32)) + 0.5,
        "bn2_gamma": 1.0 + 0.1 * jax.random.normal(ks[6], (planes,), jnp.float32),
        "bn2_beta": 0.1 * jax.random.normal(ks[7], (planes,), jnp.float32),
        "bn2_mean": 0.1 * jax.random.normal(ks[8], (planes,), jnp.float32),
        "bn2_var": jnp.abs(jax.random.normal(ks[9], (planes,), jnp.float32)) + 0.5,
    }

    x = jax.random.normal(ks[10], (N, C, H, W), jnp.float32)

    # BN folding + bf16 Toeplitz construction done once, outside the forward.
    prep = prepare_block_params(params, W)

    fwd = jax.jit(basic_block_forward)
    out = jax.block_until_ready(fwd(x, prep))

    ref_matched = _ref_block_bf16_matched(x, params)
    ref_f32 = _ref_block_f32(x, params)
    assert out.shape == ref_f32.shape

    err_matched = float(jnp.max(jnp.abs(out - ref_matched)))
    err_f32 = float(jnp.max(jnp.abs(out - ref_f32)))
    # Tight check against a reference with matching precision (bf16 MXU
    # operands, f32 accumulation) -- verifies the Toeplitz/halo/fusion logic.
    assert err_matched < 5e-3, ("matched-precision mismatch", err_matched)
    # Sanity check against the pure-f32 PyTorch-semantics reference
    # (difference is bf16 matmul rounding only, ~1e-2 at these magnitudes).
    assert err_f32 < 1e-1, ("f32 reference mismatch", err_f32)

    print("KERNEL_OK")
</pallas_src>

<mosaic_0001>
module attributes {stable_mosaic.version = 11 : i64} {
  func.func @kernel(%arg0: i32, %arg1: memref<128x128xf32, #tpu.memory_space<vmem>>, %arg2: memref<384x128xbf16, #tpu.memory_space<vmem>>, %arg3: memref<1x128xf32, #tpu.memory_space<vmem>>, %arg4: memref<384x128xbf16, #tpu.memory_space<vmem>>, %arg5: memref<1x128xf32, #tpu.memory_space<vmem>>, %arg6: memref<128x128xf32, #tpu.memory_space<vmem>>, %arg7: memref<130x128xf32, #tpu.memory_space<vmem>>) attributes {dimension_semantics = [#tpu.dimension_semantics<parallel>], iteration_bounds = array<i64: 2>, scalar_prefetch = 0 : i64, scratch_operands = 1 : i64, tpu.core_type = #tpu.core_type<tc>, window_params = [{transform_indices = @transform_0, window_bounds = array<i64: 128, 128>}, {pipeline_mode = #tpu.pipeline_mode<synchronous>, transform_indices = @transform_1, window_bounds = array<i64: 384, 128>}, {pipeline_mode = #tpu.pipeline_mode<synchronous>, transform_indices = @transform_2, window_bounds = array<i64: 1, 128>}, {pipeline_mode = #tpu.pipeline_mode<synchronous>, transform_indices = @transform_3, window_bounds = array<i64: 384, 128>}, {pipeline_mode = #tpu.pipeline_mode<synchronous>, transform_indices = @transform_4, window_bounds = array<i64: 1, 128>}, {transform_indices = @transform_5, window_bounds = array<i64: 128, 128>}]} {
    %c0 = arith.constant 0 : index
    %c0_0 = arith.constant 0 : index
    %0 = vector.load %arg1[%c0, %c0_0] : memref<128x128xf32, #tpu.memory_space<vmem>>, vector<128x128xf32>
    %cst = arith.constant 0.000000e+00 : f32
    %1 = vector.broadcast %cst : f32 to vector<1x128xf32>
    %2 = tpu.iota {dimensions = array<i32: 0>} : vector<128x128xi32>
    %c16_i32 = arith.constant 16 : i32
    %c0_i32 = arith.constant 0 : i32
    %3 = arith.cmpi eq, %c16_i32, %c0_i32 : i32
    %c1_i32 = arith.constant 1 : i32
    %4 = arith.select %3, %c1_i32, %c16_i32 : i32
    %5 = vector.broadcast %4 : i32 to vector<128x128xi32>
    %6 = arith.remsi %2, %5 : vector<128x128xi32>
    %c0_i32_1 = arith.constant 0 : i32
    %7 = vector.broadcast %c0_i32_1 : i32 to vector<128x128xi32>
    %8 = arith.cmpi ne, %6, %7 : vector<128x128xi32>
    %c0_i32_2 = arith.constant 0 : i32
    %9 = vector.broadcast %c0_i32_2 : i32 to vector<128x128xi32>
    %10 = arith.cmpi slt, %6, %9 : vector<128x128xi32>
    %c0_i32_3 = arith.constant 0 : i32
    %11 = arith.cmpi slt, %4, %c0_i32_3 : i32
    %12 = vector.broadcast %11 : i1 to vector<128x128xi1>
    %13 = vector.broadcast %12 : vector<128x128xi1> to vector<128x128xi1>
    %14 = arith.xori %10, %13 : vector<128x128xi1>
    %15 = arith.andi %14, %8 : vector<128x128xi1>
    %16 = vector.broadcast %4 : i32 to vector<128x128xi32>
    %17 = arith.addi %6, %16 : vector<128x128xi32>
    %18 = arith.select %15, %17, %6 : vector<128x128xi1>, vector<128x128xi32>
    %c0_i32_4 = arith.constant 0 : i32
    %19 = vector.broadcast %c0_i32_4 : i32 to vector<128x128xi32>
    %20 = arith.cmpi eq, %18, %19 : vector<128x128xi32>
    %c15_i32 = arith.constant 15 : i32
    %21 = vector.broadcast %c15_i32 : i32 to vector<128x128xi32>
    %22 = arith.cmpi eq, %18, %21 : vector<128x128xi32>
    %c0_5 = arith.constant 0 : index
    %c0_6 = arith.constant 0 : index
    %23 = vector.load %arg7[%c0_5, %c0_6] : memref<130x128xf32, #tpu.memory_space<vmem>>, vector<1x128xf32>
    tpu.vector_store %arg7[%c0_5, %c0_6], %1 {strides = array<i32>} : memref<130x128xf32, #tpu.memory_space<vmem>>, vector<1x128xf32>,
    %c129 = arith.constant 129 : index
    %c0_7 = arith.constant 0 : index
    %24 = vector.load %arg7[%c129, %c0_7] : memref<130x128xf32, #tpu.memory_space<vmem>>, vector<1x128xf32>
    tpu.vector_store %arg7[%c129, %c0_7], %1 {strides = array<i32>} : memref<130x128xf32, #tpu.memory_space<vmem>>, vector<1x128xf32>,
    %c1 = arith.constant 1 : index
    %c0_8 = arith.constant 0 : index
    %25 = vector.load %arg7[%c1, %c0_8] : memref<130x128xf32, #tpu.memory_space<vmem>>, vector<128x128xf32>
    tpu.vector_store %arg7[%c1, %c0_8], %0 {strides = array<i32>} : memref<130x128xf32, #tpu.memory_space<vmem>>, vector<128x128xf32>,
    %c0_9 = arith.constant 0 : index
    %c0_10 = arith.constant 0 : index
    %26 = vector.load %arg7[%c0_9, %c0_10] : memref<130x128xf32, #tpu.memory_space<vmem>>, vector<128x128xf32>
    %cst_11 = arith.constant 0.000000e+00 : f32
    %27 = vector.broadcast %cst_11 : f32 to vector<128x128xf32>
    %28 = arith.select %20, %27, %26 : vector<128x128xi1>, vector<128x128xf32>
    %c2 = arith.constant 2 : index
    %c0_12 = arith.constant 0 : index
    %29 = vector.load %arg7[%c2, %c0_12] : memref<130x128xf32, #tpu.memory_space<vmem>>, vector<128x128xf32>
    %cst_13 = arith.constant 0.000000e+00 : f32
    %30 = vector.broadcast %cst_13 : f32 to vector<128x128xf32>
    %31 = arith.select %22, %30, %29 : vector<128x128xi1>, vector<128x128xf32>
    %32 = arith.truncf %28 : vector<128x128xf32> to vector<128x128xbf16>
    %33 = arith.truncf %0 : vector<128x128xf32> to vector<128x128xbf16>
    %34 = arith.truncf %31 : vector<128x128xf32> to vector<128x128xbf16>
    %35 = tpu.concatenate %32, %33, %34 in 1 : vector<128x128xbf16>, vector<128x128xbf16>, vector<128x128xbf16> -> vector<128x384xbf16>
    %c0_14 = arith.constant 0 : index
    %c0_15 = arith.constant 0 : index
    %36 = vector.load %arg2[%c0_14, %c0_15] : memref<384x128xbf16, #tpu.memory_space<vmem>>, vector<384x128xbf16>
    %cst_16 = arith.constant dense<0.000000e+00> : vector<128x128xf32>
    %37 = tpu.matmul %35, %36, %cst_16 {dimension_numbers = #tpu.dot_dimension_numbers<[1], [0], [0], [1], [0, 0, 1, 1], [], []>} : vector<128x384xbf16>, vector<384x128xbf16>, vector<128x128xf32> -> vector<128x128xf32>
    %c0_17 = arith.constant 0 : index
    %c0_18 = arith.constant 0 : index
    %38 = vector.load %arg3[%c0_17, %c0_18] : memref<1x128xf32, #tpu.memory_space<vmem>>, vector<1x128xf32>
    %39 = vector.broadcast %38 : vector<1x128xf32> to vector<128x128xf32>
    %40 = arith.addf %37, %39 : vector<128x128xf32>
    %cst_19 = arith.constant 0.000000e+00 : f32
    %41 = vector.broadcast %cst_19 : f32 to vector<128x128xf32>
    %42 = arith.maximumf %40, %41 : vector<128x128xf32>
    %c1_20 = arith.constant 1 : index
    %c0_21 = arith.constant 0 : index
    %43 = vector.load %arg7[%c1_20, %c0_21] : memref<130x128xf32, #tpu.memory_space<vmem>>, vector<128x128xf32>
    tpu.vector_store %arg7[%c1_20, %c0_21], %42 {strides = array<i32>} : memref<130x128xf32, #tpu.memory_space<vmem>>, vector<128x128xf32>,
    %c0_22 = arith.constant 0 : index
    %c0_23 = arith.constant 0 : index
    %44 = vector.load %arg7[%c0_22, %c0_23] : memref<130x128xf32, #tpu.memory_space<vmem>>, vector<128x128xf32>
    %cst_24 = arith.constant 0.000000e+00 : f32
    %45 = vector.broadcast %cst_24 : f32 to vector<128x128xf32>
    %46 = arith.select %20, %45, %44 : vector<128x128xi1>, vector<128x128xf32>
    %c2_25 = arith.constant 2 : index
    %c0_26 = arith.constant 0 : index
    %47 = vector.load %arg7[%c2_25, %c0_26] : memref<130x128xf32, #tpu.memory_space<vmem>>, vector<128x128xf32>
    %cst_27 = arith.constant 0.000000e+00 : f32
    %48 = vector.broadcast %cst_27 : f32 to vector<128x128xf32>
    %49 = arith.select %22, %48, %47 : vector<128x128xi1>, vector<128x128xf32>
    %50 = arith.truncf %46 : vector<128x128xf32> to vector<128x128xbf16>
    %51 = arith.truncf %42 : vector<128x128xf32> to vector<128x128xbf16>
    %52 = arith.truncf %49 : vector<128x128xf32> to vector<128x128xbf16>
    %53 = tpu.concatenate %50, %51, %52 in 1 : vector<128x128xbf16>, vector<128x128xbf16>, vector<128x128xbf16> -> vector<128x384xbf16>
    %c0_28 = arith.constant 0 : index
    %c0_29 = arith.constant 0 : index
    %54 = vector.load %arg4[%c0_28, %c0_29] : memref<384x128xbf16, #tpu.memory_space<vmem>>, vector<384x128xbf16>
    %cst_30 = arith.constant dense<0.000000e+00> : vector<128x128xf32>
    %55 = tpu.matmul %53, %54, %cst_30 {dimension_numbers = #tpu.dot_dimension_numbers<[1], [0], [0], [1], [0, 0, 1, 1], [], []>} : vector<128x384xbf16>, vector<384x128xbf16>, vector<128x128xf32> -> vector<128x128xf32>
    %c0_31 = arith.constant 0 : index
    %c0_32 = arith.constant 0 : index
    %56 = vector.load %arg5[%c0_31, %c0_32] : memref<1x128xf32, #tpu.memory_space<vmem>>, vector<1x128xf32>
    %57 = vector.broadcast %56 : vector<1x128xf32> to vector<128x128xf32>
    %58 = arith.addf %55, %57 : vector<128x128xf32>
    %59 = arith.addf %58, %0 : vector<128x128xf32>
    %cst_33 = arith.constant 0.000000e+00 : f32
    %60 = vector.broadcast %cst_33 : f32 to vector<128x128xf32>
    %61 = arith.maximumf %59, %60 : vector<128x128xf32>
    %c0_34 = arith.constant 0 : index
    %c0_35 = arith.constant 0 : index
    %62 = vector.load %arg6[%c0_34, %c0_35] : memref<128x128xf32, #tpu.memory_space<vmem>>, vector<128x128xf32>
    tpu.vector_store %arg6[%c0_34, %c0_35], %61 {strides = array<i32>} : memref<128x128xf32, #tpu.memory_space<vmem>>, vector<128x128xf32>,
    return
  }
  func.func @transform_0(%arg0: i32) -> (i32, i32) {
    %c0_i32 = arith.constant 0 : i32
    %c0_i32_0 = arith.constant 0 : i32
    return %arg0, %c0_i32 : i32, i32
  }
  func.func @transform_1(%arg0: i32) -> (i32, i32) {
    %c0_i32 = arith.constant 0 : i32
    %c0_i32_0 = arith.constant 0 : i32
    %c0_i32_1 = arith.constant 0 : i32
    return %c0_i32, %c0_i32_0 : i32, i32
  }
  func.func @transform_2(%arg0: i32) -> (i32, i32) {
    %c0_i32 = arith.constant 0 : i32
    %c0_i32_0 = arith.constant 0 : i32
    %c0_i32_1 = arith.constant 0 : i32
    return %c0_i32, %c0_i32_0 : i32, i32
  }
  func.func @transform_3(%arg0: i32) -> (i32, i32) {
    %c0_i32 = arith.constant 0 : i32
    %c0_i32_0 = arith.constant 0 : i32
    %c0_i32_1 = arith.constant 0 : i32
    return %c0_i32, %c0_i32_0 : i32, i32
  }
  func.func @transform_4(%arg0: i32) -> (i32, i32) {
    %c0_i32 = arith.constant 0 : i32
    %c0_i32_0 = arith.constant 0 : i32
    %c0_i32_1 = arith.constant 0 : i32
    return %c0_i32, %c0_i32_0 : i32, i32
  }
  func.func @transform_5(%arg0: i32) -> (i32, i32) {
    %c0_i32 = arith.constant 0 : i32
    %c0_i32_0 = arith.constant 0 : i32
    return %arg0, %c0_i32 : i32, i32
  }
}

</mosaic_0001>

<llo_original>
// kernel: basic_block_forward.1
$region0: #{basic_block_forward.1}
  #allocation0 [shape = 'u32[]', space=smem, size = 0x4, offset = 0x4, fixed_abs, tag = 'smem constant byte address 0x4 - core index']
  #allocation1 [shape = 'u32[72,128]{1,0:T(1,128)}', space=vmem, size = 0x9000, scoped, tag = 'internal scratch']
  #allocation2 [shape = 'f32[130,128]{1,0:T(8,128)}', space=vmem, size = 0x11000, scoped, tag = 'scratch operand']
  %s0 = inlined_call_operand.vmem [shape: f32[256,128], index: 0, kind: input, shape index: {}]
  %s1 = inlined_call_operand.vmem [shape: bf16[384,128], index: 1, kind: input, shape index: {}]
  %s2 = inlined_call_operand.vmem [shape: f32[1,128], index: 2, kind: input, shape index: {}]
  %s3 = inlined_call_operand.vmem [shape: bf16[384,128], index: 3, kind: input, shape index: {}]
  %s4 = inlined_call_operand.vmem [shape: f32[1,128], index: 4, kind: input, shape index: {}]
  %s5 = inlined_call_operand.vmem [shape: f32[256,128], index: 5, kind: output, shape index: {}]
  %s6 = sld [smem:[#allocation0]]
  $region53: #{basic_block_forward.1} parent=0
    _
  %s8 = ssub.s32 1, %s6
  %s9 = scalar_select 0, %s8, %s6
  loop: start=0, step=1, limit=4
  $region2: #{basic_block_forward.1} parent=0 // loop_pre_header
    _
  $region3: #{basic_block_forward.1} parent=0 // loop_header
    %s11 = sphi 0, %s15
    %p12 = scmp.ge.s32.totalorder %s11, 4
    %s21 = sphi 0, %s23
    %s24 = sphi 0, %s21
    %s25 = sphi 0, %s24
    %s41 = sphi 0, %s25
    %s45 = sphi 0, %s45
    %s47 = sphi 0, %s45
    %s48 = sphi 0, %s47
    %s62 = sphi 0, %s48
    %s66 = sphi 0, %s66
    %s68 = sphi 0, %s66
    %s69 = sphi 0, %s68
    %s83 = sphi 0, %s69
    %s87 = sphi 0, %s87
    %s89 = sphi 0, %s87
    %s90 = sphi 0, %s89
    %s104 = sphi 0, %s90
    %s108 = sphi 0, %s108
    %s110 = sphi 0, %s108
    %s111 = sphi 0, %s110
    %s125 = sphi 0, %s111
    %s131 = sphi 0, %s133
    %s134 = sphi 0, %s131
    %s135 = sphi 0, %s134
    %s151 = sphi 0, %s135
  $region4: #{basic_block_forward.1} parent=0 // loop_header_branch
    %14 = sbr.rel (%p12) target = $region8
  $region5: #{basic_block_forward.1} parent=0 // loop_body
    %s16 = ssub.s32 %s11, 1
    %s17 = ssub.s32 %s11, 2
    %s18 = sadd.s32 %s11, 1
    %s19 = ssub.s32 %s11, %s18
    %p20 = scmp.eq.s32.totalorder %s19, 0
    %s22 = sadd.s32 %s21, 1
    %s23 = scalar_select %p20, %s21, %s22
    %p26 = pneg %p20
    %p27 = scmp.eq.s32.totalorder %s11, 1
    %p28 = por %p26, %p27
    %p29 = scmp.ne.s32.totalorder %s21, %s24
    %p30 = scmp.eq.s32.totalorder %s11, 0
    %p31 = por %p29, %p30
    %p32 = scmp.ne.s32.totalorder %s21, %s24
    %p33 = scmp.eq.s32.totalorder %s16, 1
    %p34 = por %p32, %p33
    %p35 = scmp.ne.s32.totalorder %s24, %s25
    %p36 = scmp.eq.s32.totalorder %s16, 0
    %p37 = por %p35, %p36
    %p38 = scmp.ne.s32.totalorder %s24, %s25
    %p39 = scmp.eq.s32.totalorder %s17, 1
    %p40 = por %p38, %p39
    %p42 = scmp.ne.s32.totalorder %s25, %s41
    %p43 = scmp.eq.s32.totalorder %s17, 0
    %p44 = por %p42, %p43
    %s46 = sadd.s32 %s45, 1
    %p49 = scmp.eq.s32.totalorder %s11, 1
    %p50 = scmp.ne.s32.totalorder %s45, %s47
    %p51 = scmp.eq.s32.totalorder %s11, 0
    %p52 = por %p50, %p51
    %p53 = scmp.ne.s32.totalorder %s45, %s47
    %p54 = scmp.eq.s32.totalorder %s16, 1
    %p55 = por %p53, %p54
    %p56 = scmp.ne.s32.totalorder %s47, %s48
    %p57 = scmp.eq.s32.totalorder %s16, 0
    %p58 = por %p56, %p57
    %p59 = scmp.ne.s32.totalorder %s47, %s48
    %p60 = scmp.eq.s32.totalorder %s17, 1
    %p61 = por %p59, %p60
    %p63 = scmp.ne.s32.totalorder %s48, %s62
    %p64 = scmp.eq.s32.totalorder %s17, 0
    %p65 = por %p63, %p64
    %s67 = sadd.s32 %s66, 1
    %p70 = scmp.eq.s32.totalorder %s11, 1
    %p71 = scmp.ne.s32.totalorder %s66, %s68
    %p72 = scmp.eq.s32.totalorder %s11, 0
    %p73 = por %p71, %p72
    %p74 = scmp.ne.s32.totalorder %s66, %s68
    %p75 = scmp.eq.s32.totalorder %s16, 1
    %p76 = por %p74, %p75
    %p77 = scmp.ne.s32.totalorder %s68, %s69
    %p78 = scmp.eq.s32.totalorder %s16, 0
    %p79 = por %p77, %p78
    %p80 = scmp.ne.s32.totalorder %s68, %s69
    %p81 = scmp.eq.s32.totalorder %s17, 1
    %p82 = por %p80, %p81
    %p84 = scmp.ne.s32.totalorder %s69, %s83
    %p85 = scmp.eq.s32.totalorder %s17, 0
    %p86 = por %p84, %p85
    %s88 = sadd.s32 %s87, 1
    %p91 = scmp.eq.s32.totalorder %s11, 1
    %p92 = scmp.ne.s32.totalorder %s87, %s89
    %p93 = scmp.eq.s32.totalorder %s11, 0
    %p94 = por %p92, %p93
    %p95 = scmp.ne.s32.totalorder %s87, %s89
    %p96 = scmp.eq.s32.totalorder %s16, 1
    %p97 = por %p95, %p96
    %p98 = scmp.ne.s32.totalorder %s89, %s90
    %p99 = scmp.eq.s32.totalorder %s16, 0
    %p100 = por %p98, %p99
    %p101 = scmp.ne.s32.totalorder %s89, %s90
    %p102 = scmp.eq.s32.totalorder %s17, 1
    %p103 = por %p101, %p102
    %p105 = scmp.ne.s32.totalorder %s90, %s104
    %p106 = scmp.eq.s32.totalorder %s17, 0
    %p107 = por %p105, %p106
    %s109 = sadd.s32 %s108, 1
    %p112 = scmp.eq.s32.totalorder %s11, 1
    %p113 = scmp.ne.s32.totalorder %s108, %s110
    %p114 = scmp.eq.s32.totalorder %s11, 0
    %p115 = por %p113, %p114
    %p116 = scmp.ne.s32.totalorder %s108, %s110
    %p117 = scmp.eq.s32.totalorder %s16, 1
    %p118 = por %p116, %p117
    %p119 = scmp.ne.s32.totalorder %s110, %s111
    %p120 = scmp.eq.s32.totalorder %s16, 0
    %p121 = por %p119, %p120
    %p122 = scmp.ne.s32.totalorder %s110, %s111
    %p123 = scmp.eq.s32.totalorder %s17, 1
    %p124 = por %p122, %p123
    %p126 = scmp.ne.s32.totalorder %s111, %s125
    %p127 = scmp.eq.s32.totalorder %s17, 0
    %p128 = por %p126, %p127
    %s129 = ssub.s32 %s11, %s18
    %p130 = scmp.eq.s32.totalorder %s129, 0
    %s132 = sadd.s32 %s131, 1
    %s133 = scalar_select %p130, %s131, %s132
    %p136 = pneg %p130
    %p137 = scmp.eq.s32.totalorder %s11, 1
    %p138 = por %p136, %p137
    %p139 = scmp.ne.s32.totalorder %s131, %s134
    %p140 = scmp.eq.s32.totalorder %s11, 0
    %p141 = por %p139, %p140
    %p142 = scmp.ne.s32.totalorder %s131, %s134
    %p143 = scmp.eq.s32.totalorder %s16, 1
    %p144 = por %p142, %p143
    %p145 = scmp.ne.s32.totalorder %s134, %s135
    %p146 = scmp.eq.s32.totalorder %s16, 0
    %p147 = por %p145, %p146
    %p148 = scmp.ne.s32.totalorder %s134, %s135
    %p149 = scmp.eq.s32.totalorder %s17, 1
    %p150 = por %p148, %p149
    %p152 = scmp.ne.s32.totalorder %s135, %s151
    %p153 = scmp.eq.s32.totalorder %s17, 0
    %p154 = por %p152, %p153
    %p155 = scmp.le.s32.totalorder 1, %s11
    %p156 = scmp.lt.s32.totalorder %s11, 3
    %p157 = pnand %p155, %p156
    %p158 = pneg %p157
    // Predicated region
    $region9: #{basic_block_forward.1} parent=5 // pred_check
      _
    $region10: #{basic_block_forward.1} parent=5 // pred_check_branch
      %160 = sbr.rel (%p157) target = $region12
    $region11: #{basic_block_forward.1} parent=5 // pred_region
      %s161 = ssub.s32 %s11, 1
      // Predicated region
      $region13: #{basic_block_forward.1} parent=11 // pred_check
        %p162 = pneg %p58
      $region14: #{basic_block_forward.1} parent=11 // pred_check_branch
        %164 = sbr.rel (%p162) target = $region16
      $region15: #{basic_block_forward.1} parent=11 // pred_region
        _
      $region16: #{basic_block_forward.1} parent=11 // pred_fallthru
        _
      // Predicated region
      $region17: #{basic_block_forward.1} parent=11 // pred_check
        %p165 = pneg %p79
      $region18: #{basic_block_forward.1} parent=11 // pred_check_branch
        %167 = sbr.rel (%p165) target = $region20
      $region19: #{basic_block_forward.1} parent=11 // pred_region
        _
      $region20: #{basic_block_forward.1} parent=11 // pred_fallthru
        _
      // Predicated region
      $region21: #{basic_block_forward.1} parent=11 // pred_check
        %p168 = pneg %p100
      $region22: #{basic_block_forward.1} parent=11 // pred_check_branch
        %170 = sbr.rel (%p168) target = $region24
      $region23: #{basic_block_forward.1} parent=11 // pred_region
        _
      $region24: #{basic_block_forward.1} parent=11 // pred_fallthru
        _
      // Predicated region
      $region25: #{basic_block_forward.1} parent=11 // pred_check
        %p171 = pneg %p121
      $region26: #{basic_block_forward.1} parent=11 // pred_check_branch
        %173 = sbr.rel (%p171) target = $region28
      $region27: #{basic_block_forward.1} parent=11 // pred_region
        _
      $region28: #{basic_block_forward.1} parent=11 // pred_fallthru
        _
    $region12: #{basic_block_forward.1} parent=5 // pred_fallthru
      _
    %p174 = scmp.lt.s32.totalorder %s11, 2
    // Predicated region
    $region29: #{basic_block_forward.1} parent=5 // pred_check
      %p175 = pneg %p174
    $region30: #{basic_block_forward.1} parent=5 // pred_check_branch
      %177 = sbr.rel (%p175) target = $region32
    $region31: #{basic_block_forward.1} parent=5 // pred_region
      // Predicated region
      $region33: #{basic_block_forward.1} parent=31 // pred_check
        %p178 = pneg %p31
      $region34: #{basic_block_forward.1} parent=31 // pred_check_branch
        %180 = sbr.rel (%p178) target = $region36
      $region35: #{basic_block_forward.1} parent=31 // pred_region
        %s181 = smul.u32 16, %s11
        %p182 = scmp.lt.s32.totalorder %s181, 31
        %s183 = scalar_select %p182, %s181, 31
        %s184 = smul.addr %s183, 8
        %s185 = scalar_lea.vmem %s0, %s184
        %s186 = smul.u32 16, %s11
      $region36: #{basic_block_forward.1} parent=31 // pred_fallthru
        _
    $region32: #{basic_block_forward.1} parent=5 // pred_fallthru
      _
    %p187 = scmp.le.s32.totalorder 1, %s11
    %p188 = scmp.lt.s32.totalorder %s11, 3
    %p189 = pnand %p187, %p188
    %p190 = pneg %p189
    // Predicated region
    $region37: #{basic_block_forward.1} parent=5 // pred_check
      _
    $region38: #{basic_block_forward.1} parent=5 // pred_check_branch
      %192 = sbr.rel (%p189) target = $region40
    $region39: #{basic_block_forward.1} parent=5 // pred_region
      %s193 = ssub.s32 %s11, 1
      %s194 = smul.u32 16, %s16
      %p195 = scmp.lt.s32.totalorder %s194, 31
      %s196 = scalar_select %p195, %s194, 31
      %s197 = smul.addr %s196, 8
      %s198 = scalar_lea.vmem %s0, %s197
      %p199 = pneg %p37
      %p200 = pneg %p34
      %p201 = pneg %p58
      %p202 = pneg %p55
      %p203 = pneg %p79
      %p204 = pneg %p76
      %p205 = pneg %p100
      %p206 = pneg %p97
      %p207 = pneg %p121
      %p208 = pneg %p118
      %p209 = pneg %p147
      %p210 = pneg %p144
      %s211 = smul.u32 16, %s16
      %p212 = scmp.lt.s32.totalorder %s211, 31
      %s213 = scalar_select %p212, %s211, 31
      %s214 = smul.addr %s213, 8
      %s215 = scalar_lea.vmem %s5, %s214
      %s216 = smul.u32 16, %s16
      %p217 = scmp.lt.s32.totalorder %s216, 31
      %s218 = scalar_select %p217, %s216, 31
      %s219 = smul.addr %s218, 8
      %s220 = scalar_lea.vmem %s0, %s219
      %s221 = smul.u32 16, %s16
      %s222 = smul.u32 16, %s16
      %p223 = scmp.lt.s32.totalorder %s222, 31
      %s224 = scalar_select %p223, %s222, 31
      %s225 = smul.addr %s224, 8
      %s226 = scalar_lea.vmem %s5, %s225
      %s227 = smul.u32 16, %s16
      %v228 = vld [vmem:[%s220] sm:$0xff]
      %v229 = vld [vmem:[%s220 + $0x8] sm:$0xff]
      %v230 = vld [vmem:[%s220 + $0x10] sm:$0xff]
      %v231 = vld [vmem:[%s220 + $0x18] sm:$0xff]
      %v232 = vld [vmem:[%s220 + $0x20] sm:$0xff]
      %v233 = vld [vmem:[%s220 + $0x28] sm:$0xff]
      %v234 = vld [vmem:[%s220 + $0x30] sm:$0xff]
      %v235 = vld [vmem:[%s220 + $0x38] sm:$0xff]
      %v236 = vld [vmem:[%s220 + $0x40] sm:$0xff]
      %v237 = vld [vmem:[%s220 + $0x48] sm:$0xff]
      %v238 = vld [vmem:[%s220 + $0x50] sm:$0xff]
      %v239 = vld [vmem:[%s220 + $0x58] sm:$0xff]
      %v240 = vld [vmem:[%s220 + $0x60] sm:$0xff]
      %v241 = vld [vmem:[%s220 + $0x68] sm:$0xff]
      %v242 = vld [vmem:[%s220 + $0x70] sm:$0xff]
      %v243 = vld [vmem:[%s220 + $0x78] sm:$0xff]
      %v244 = vlaneseq
      %v245 = vshrl.u32 %v244, 7
      %v246 = vadd.s32 %v245, 8
      %v247 = vadd.s32 %v245, 16
      %v248 = vadd.s32 %v245, 24
      %v249 = vadd.s32 %v245, 32
      %v250 = vadd.s32 %v245, 40
      %v251 = vadd.s32 %v245, 48
      %v252 = vadd.s32 %v245, 56
      %v253 = vadd.s32 %v245, 64
      %v254 = vadd.s32 %v245, 72
      %v255 = vadd.s32 %v245, 80
      %v256 = vadd.s32 %v245, 88
      %v257 = vadd.s32 %v245, 96
      %v258 = vadd.s32 %v245, 104
      %v259 = vadd.s32 %v245, 112
      %v260 = vadd.s32 %v245, 120
      %vm261 = vcmp.lt.s32.totalorder %v245, 0
      %v262 = vsub.s32 0, %v245
      %v263 = vsel %vm261, %v262, %v245
      %v264 = vshrl.u32 %v263, 4
      %v265 = vand.u32 %v263, 15
      %v266 = vsub.s32 0, %v265
      %v267 = vsel %vm261, %v266, %v265
      %vm268 = vcmp.lt.s32.totalorder %v246, 0
      %v269 = vsub.s32 0, %v246
      %v270 = vsel %vm268, %v269, %v246
      %v271 = vshrl.u32 %v270, 4
      %v272 = vand.u32 %v270, 15
      %v273 = vsub.s32 0, %v272
      %v274 = vsel %vm268, %v273, %v272
      %vm275 = vcmp.lt.s32.totalorder %v247, 0
      %v276 = vsub.s32 0, %v247
      %v277 = vsel %vm275, %v276, %v247
      %v278 = vshrl.u32 %v277, 4
      %v279 = vand.u32 %v277, 15
      %v280 = vsub.s32 0, %v279
      %v281 = vsel %vm275, %v280, %v279
      %vm282 = vcmp.lt.s32.totalorder %v248, 0
      %v283 = vsub.s32 0, %v248
      %v284 = vsel %vm282, %v283, %v248
      %v285 = vshrl.u32 %v284, 4
      %v286 = vand.u32 %v284, 15
      %v287 = vsub.s32 0, %v286
      %v288 = vsel %vm282, %v287, %v286
      %vm289 = vcmp.lt.s32.totalorder %v249, 0
      %v290 = vsub.s32 0, %v249
      %v291 = vsel %vm289, %v290, %v249
      %v292 = vshrl.u32 %v291, 4
      %v293 = vand.u32 %v291, 15
      %v294 = vsub.s32 0, %v293
      %v295 = vsel %vm289, %v294, %v293
      %vm296 = vcmp.lt.s32.totalorder %v250, 0
      %v297 = vsub.s32 0, %v250
      %v298 = vsel %vm296, %v297, %v250
      %v299 = vshrl.u32 %v298, 4
      %v300 = vand.u32 %v298, 15
      %v301 = vsub.s32 0, %v300
      %v302 = vsel %vm296, %v301, %v300
      %vm303 = vcmp.lt.s32.totalorder %v251, 0
      %v304 = vsub.s32 0, %v251
      %v305 = vsel %vm303, %v304, %v251
      %v306 = vshrl.u32 %v305, 4
      %v307 = vand.u32 %v305, 15
      %v308 = vsub.s32 0, %v307
      %v309 = vsel %vm303, %v308, %v307
      %vm310 = vcmp.lt.s32.totalorder %v252, 0
      %v311 = vsub.s32 0, %v252
      %v312 = vsel %vm310, %v311, %v252
      %v313 = vshrl.u32 %v312, 4
      %v314 = vand.u32 %v312, 15
      %v315 = vsub.s32 0, %v314
      %v316 = vsel %vm310, %v315, %v314
      %vm317 = vcmp.lt.s32.totalorder %v253, 0
      %v318 = vsub.s32 0, %v253
      %v319 = vsel %vm317, %v318, %v253
      %v320 = vshrl.u32 %v319, 4
      %v321 = vand.u32 %v319, 15
      %v322 = vsub.s32 0, %v321
      %v323 = vsel %vm317, %v322, %v321
      %vm324 = vcmp.lt.s32.totalorder %v254, 0
      %v325 = vsub.s32 0, %v254
      %v326 = vsel %vm324, %v325, %v254
      %v327 = vshrl.u32 %v326, 4
      %v328 = vand.u32 %v326, 15
      %v329 = vsub.s32 0, %v328
      %v330 = vsel %vm324, %v329, %v328
      %vm331 = vcmp.lt.s32.totalorder %v255, 0
      %v332 = vsub.s32 0, %v255
      %v333 = vsel %vm331, %v332, %v255
      %v334 = vshrl.u32 %v333, 4
      %v335 = vand.u32 %v333, 15
      %v336 = vsub.s32 0, %v335
      %v337 = vsel %vm331, %v336, %v335
      %vm338 = vcmp.lt.s32.totalorder %v256, 0
      %v339 = vsub.s32 0, %v256
      %v340 = vsel %vm338, %v339, %v256
      %v341 = vshrl.u32 %v340, 4
      %v342 = vand.u32 %v340, 15
      %v343 = vsub.s32 0, %v342
      %v344 = vsel %vm338, %v343, %v342
      %vm345 = vcmp.lt.s32.totalorder %v257, 0
      %v346 = vsub.s32 0, %v257
      %v347 = vsel %vm345, %v346, %v257
      %v348 = vshrl.u32 %v347, 4
      %v349 = vand.u32 %v347, 15
      %v350 = vsub.s32 0, %v349
      %v351 = vsel %vm345, %v350, %v349
      %vm352 = vcmp.lt.s32.totalorder %v258, 0
      %v353 = vsub.s32 0, %v258
      %v354 = vsel %vm352, %v353, %v258
      %v355 = vshrl.u32 %v354, 4
      %v356 = vand.u32 %v354, 15
      %v357 = vsub.s32 0, %v356
      %v358 = vsel %vm352, %v357, %v356
      %vm359 = vcmp.lt.s32.totalorder %v259, 0
      %v360 = vsub.s32 0, %v259
      %v361 = vsel %vm359, %v360, %v259
      %v362 = vshrl.u32 %v361, 4
      %v363 = vand.u32 %v361, 15
      %v364 = vsub.s32 0, %v363
      %v365 = vsel %vm359, %v364, %v363
      %vm366 = vcmp.lt.s32.totalorder %v260, 0
      %v367 = vsub.s32 0, %v260
      %v368 = vsel %vm366, %v367, %v260
      %v369 = vshrl.u32 %v368, 4
      %v370 = vand.u32 %v368, 15
      %v371 = vsub.s32 0, %v370
      %v372 = vsel %vm366, %v371, %v370
      %vm373 = vcmp.ne.s32.totalorder %v267, 0
      %vm374 = vcmp.ne.s32.totalorder %v274, 0
      %vm375 = vcmp.ne.s32.totalorder %v281, 0
      %vm376 = vcmp.ne.s32.totalorder %v288, 0
      %vm377 = vcmp.ne.s32.totalorder %v295, 0
      %vm378 = vcmp.ne.s32.totalorder %v302, 0
      %vm379 = vcmp.ne.s32.totalorder %v309, 0
      %vm380 = vcmp.ne.s32.totalorder %v316, 0
      %vm381 = vcmp.ne.s32.totalorder %v323, 0
      %vm382 = vcmp.ne.s32.totalorder %v330, 0
      %vm383 = vcmp.ne.s32.totalorder %v337, 0
      %vm384 = vcmp.ne.s32.totalorder %v344, 0
      %vm385 = vcmp.ne.s32.totalorder %v351, 0
      %vm386 = vcmp.ne.s32.totalorder %v358, 0
      %vm387 = vcmp.ne.s32.totalorder %v365, 0
      %vm388 = vcmp.ne.s32.totalorder %v372, 0
      %vm389 = vcmp.lt.s32.totalorder %v267, 0
      %vm390 = vcmp.lt.s32.totalorder %v274, 0
      %vm391 = vcmp.lt.s32.totalorder %v281, 0
      %vm392 = vcmp.lt.s32.totalorder %v288, 0
      %vm393 = vcmp.lt.s32.totalorder %v295, 0
      %vm394 = vcmp.lt.s32.totalorder %v302, 0
      %vm395 = vcmp.lt.s32.totalorder %v309, 0
      %vm396 = vcmp.lt.s32.totalorder %v316, 0
      %vm397 = vcmp.lt.s32.totalorder %v323, 0
      %vm398 = vcmp.lt.s32.totalorder %v330, 0
      %vm399 = vcmp.lt.s32.totalorder %v337, 0
      %vm400 = vcmp.lt.s32.totalorder %v344, 0
      %vm401 = vcmp.lt.s32.totalorder %v351, 0
      %vm402 = vcmp.lt.s32.totalorder %v358, 0
      %vm403 = vcmp.lt.s32.totalorder %v365, 0
      %vm404 = vcmp.lt.s32.totalorder %v372, 0
      %vm405 = vmand %vm389, %vm373
      %vm406 = vmand %vm390, %vm374
      %vm407 = vmand %vm391, %vm375
      %vm408 = vmand %vm392, %vm376
      %vm409 = vmand %vm393, %vm377
      %vm410 = vmand %vm394, %vm378
      %vm411 = vmand %vm395, %vm379
      %vm412 = vmand %vm396, %vm380
      %vm413 = vmand %vm397, %vm381
      %vm414 = vmand %vm398, %vm382
      %vm415 = vmand %vm399, %vm383
      %vm416 = vmand %vm400, %vm384
      %vm417 = vmand %vm401, %vm385
      %vm418 = vmand %vm402, %vm386
      %vm419 = vmand %vm403, %vm387
      %vm420 = vmand %vm404, %vm388
      %v421 = vadd.s32 %v267, 16
      %v422 = vadd.s32 %v274, 16
      %v423 = vadd.s32 %v281, 16
      %v424 = vadd.s32 %v288, 16
      %v425 = vadd.s32 %v295, 16
      %v426 = vadd.s32 %v302, 16
      %v427 = vadd.s32 %v309, 16
      %v428 = vadd.s32 %v316, 16
      %v429 = vadd.s32 %v323, 16
      %v430 = vadd.s32 %v330, 16
      %v431 = vadd.s32 %v337, 16
      %v432 = vadd.s32 %v344, 16
      %v433 = vadd.s32 %v351, 16
      %v434 = vadd.s32 %v358, 16
      %v435 = vadd.s32 %v365, 16
      %v436 = vadd.s32 %v372, 16
      %v437 = vsel %vm405, %v421, %v267
      %v438 = vsel %vm406, %v422, %v274
      %v439 = vsel %vm407, %v423, %v281
      %v440 = vsel %vm408, %v424, %v288
      %v441 = vsel %vm409, %v425, %v295
      %v442 = vsel %vm410, %v426, %v302
      %v443 = vsel %vm411, %v427, %v309
      %v444 = vsel %vm412, %v428, %v316
      %v445 = vsel %vm413, %v429, %v323
      %v446 = vsel %vm414, %v430, %v330
      %v447 = vsel %vm415, %v431, %v337
      %v448 = vsel %vm416, %v432, %v344
      %v449 = vsel %vm417, %v433, %v351
      %v450 = vsel %vm418, %v434, %v358
      %v451 = vsel %vm419, %v435, %v365
      %v452 = vsel %vm420, %v436, %v372
      %vm453 = vcmp.eq.s32.totalorder %v437, 0
      %vm454 = vcmp.eq.s32.totalorder %v438, 0
      %vm455 = vcmp.eq.s32.totalorder %v439, 0
      %vm456 = vcmp.eq.s32.totalorder %v440, 0
      %vm457 = vcmp.eq.s32.totalorder %v441, 0
      %vm458 = vcmp.eq.s32.totalorder %v442, 0
      %vm459 = vcmp.eq.s32.totalorder %v443, 0
      %vm460 = vcmp.eq.s32.totalorder %v444, 0
      %vm461 = vcmp.eq.s32.totalorder %v445, 0
      %vm462 = vcmp.eq.s32.totalorder %v446, 0
      %vm463 = vcmp.eq.s32.totalorder %v447, 0
      %vm464 = vcmp.eq.s32.totalorder %v448, 0
      %vm465 = vcmp.eq.s32.totalorder %v449, 0
      %vm466 = vcmp.eq.s32.totalorder %v450, 0
      %vm467 = vcmp.eq.s32.totalorder %v451, 0
      %vm468 = vcmp.eq.s32.totalorder %v452, 0
      %vm469 = vcmp.eq.s32.totalorder %v437, 15
      %vm470 = vcmp.eq.s32.totalorder %v438, 15
      %vm471 = vcmp.eq.s32.totalorder %v439, 15
      %vm472 = vcmp.eq.s32.totalorder %v440, 15
      %vm473 = vcmp.eq.s32.totalorder %v441, 15
      %vm474 = vcmp.eq.s32.totalorder %v442, 15
      %vm475 = vcmp.eq.s32.totalorder %v443, 15
      %vm476 = vcmp.eq.s32.totalorder %v444, 15
      %vm477 = vcmp.eq.s32.totalorder %v445, 15
      %vm478 = vcmp.eq.s32.totalorder %v446, 15
      %vm479 = vcmp.eq.s32.totalorder %v447, 15
      %vm480 = vcmp.eq.s32.totalorder %v448, 15
      %vm481 = vcmp.eq.s32.totalorder %v449, 15
      %vm482 = vcmp.eq.s32.totalorder %v450, 15
      %vm483 = vcmp.eq.s32.totalorder %v451, 15
      %vm484 = vcmp.eq.s32.totalorder %v452, 15
      %485 = vst [vmem:[#allocation2] sm:$0x1] 0.0
      %486 = vst [vmem:[#allocation2 + $0x81] sm:$0x1] 0.0
      %487 = vst [vmem:[#allocation2 + $0x1] sm:$0xff] %v228
      %488 = vst [vmem:[#allocation2 + $0x9] sm:$0xff] %v229
      %489 = vst [vmem:[#allocation2 + $0x11] sm:$0xff] %v230
      %490 = vst [vmem:[#allocation2 + $0x19] sm:$0xff] %v231
      %491 = vst [vmem:[#allocation2 + $0x21] sm:$0xff] %v232
      %492 = vst [vmem:[#allocation2 + $0x29] sm:$0xff] %v233
      %493 = vst [vmem:[#allocation2 + $0x31] sm:$0xff] %v234
      %494 = vst [vmem:[#allocation2 + $0x39] sm:$0xff] %v235
      %495 = vst [vmem:[#allocation2 + $0x41] sm:$0xff] %v236
      %496 = vst [vmem:[#allocation2 + $0x49] sm:$0xff] %v237
      %497 = vst [vmem:[#allocation2 + $0x51] sm:$0xff] %v238
      %498 = vst [vmem:[#allocation2 + $0x59] sm:$0xff] %v239
      %499 = vst [vmem:[#allocation2 + $0x61] sm:$0xff] %v240
      %500 = vst [vmem:[#allocation2 + $0x69] sm:$0xff] %v241
      %501 = vst [vmem:[#allocation2 + $0x71] sm:$0xff] %v242
      %502 = vst [vmem:[#allocation2 + $0x79] sm:$0xff] %v243
      %v503 = vld [vmem:[#allocation2] sm:$0xff]
      %v504 = vld [vmem:[#allocation2 + $0x8] sm:$0xff]
      %v505 = vld [vmem:[#allocation2 + $0x10] sm:$0xff]
      %v506 = vld [vmem:[#allocation2 + $0x18] sm:$0xff]
      %v507 = vld [vmem:[#allocation2 + $0x20] sm:$0xff]
      %v508 = vld [vmem:[#allocation2 + $0x28] sm:$0xff]
      %v509 = vld [vmem:[#allocation2 + $0x30] sm:$0xff]
      %v510 = vld [vmem:[#allocation2 + $0x38] sm:$0xff]
      %v511 = vld [vmem:[#allocation2 + $0x40] sm:$0xff]
      %v512 = vld [vmem:[#allocation2 + $0x48] sm:$0xff]
      %v513 = vld [vmem:[#allocation2 + $0x50] sm:$0xff]
      %v514 = vld [vmem:[#allocation2 + $0x58] sm:$0xff]
      %v515 = vld [vmem:[#allocation2 + $0x60] sm:$0xff]
      %v516 = vld [vmem:[#allocation2 + $0x68] sm:$0xff]
      %v517 = vld [vmem:[#allocation2 + $0x70] sm:$0xff]
      %v518 = vld [vmem:[#allocation2 + $0x78] sm:$0xff]
      %v519 = vsel %vm453, 0.0, %v503
      %v520 = vsel %vm454, 0.0, %v504
      %v521 = vsel %vm455, 0.0, %v505
      %v522 = vsel %vm456, 0.0, %v506
      %v523 = vsel %vm457, 0.0, %v507
      %v524 = vsel %vm458, 0.0, %v508
      %v525 = vsel %vm459, 0.0, %v509
      %v526 = vsel %vm460, 0.0, %v510
      %v527 = vsel %vm461, 0.0, %v511
      %v528 = vsel %vm462, 0.0, %v512
      %v529 = vsel %vm463, 0.0, %v513
      %v530 = vsel %vm464, 0.0, %v514
      %v531 = vsel %vm465, 0.0, %v515
      %v532 = vsel %vm466, 0.0, %v516
      %v533 = vsel %vm467, 0.0, %v517
      %v534 = vsel %vm468, 0.0, %v518
      %v535 = vld [vmem:[#allocation2 + $0x2] sm:$0xff]
      %v536 = vld [vmem:[#allocation2 + $0xa] sm:$0xff]
      %v537 = vld [vmem:[#allocation2 + $0x12] sm:$0xff]
      %v538 = vld [vmem:[#allocation2 + $0x1a] sm:$0xff]
      %v539 = vld [vmem:[#allocation2 + $0x22] sm:$0xff]
      %v540 = vld [vmem:[#allocation2 + $0x2a] sm:$0xff]
      %v541 = vld [vmem:[#allocation2 + $0x32] sm:$0xff]
      %v542 = vld [vmem:[#allocation2 + $0x3a] sm:$0xff]
      %v543 = vld [vmem:[#allocation2 + $0x42] sm:$0xff]
      %v544 = vld [vmem:[#allocation2 + $0x4a] sm:$0xff]
      %v545 = vld [vmem:[#allocation2 + $0x52] sm:$0xff]
      %v546 = vld [vmem:[#allocation2 + $0x5a] sm:$0xff]
      %v547 = vld [vmem:[#allocation2 + $0x62] sm:$0xff]
      %v548 = vld [vmem:[#allocation2 + $0x6a] sm:$0xff]
      %v549 = vld [vmem:[#allocation2 + $0x72] sm:$0xff]
      %v550 = vld [vmem:[#allocation2 + $0x7a] sm:$0xff]
      %v551 = vsel %vm469, 0.0, %v535
      %v552 = vsel %vm470, 0.0, %v536
      %v553 = vsel %vm471, 0.0, %v537
      %v554 = vsel %vm472, 0.0, %v538
      %v555 = vsel %vm473, 0.0, %v539
      %v556 = vsel %vm474, 0.0, %v540
      %v557 = vsel %vm475, 0.0, %v541
      %v558 = vsel %vm476, 0.0, %v542
      %v559 = vsel %vm477, 0.0, %v543
      %v560 = vsel %vm478, 0.0, %v544
      %v561 = vsel %vm479, 0.0, %v545
      %v562 = vsel %vm480, 0.0, %v546
      %v563 = vsel %vm481, 0.0, %v547
      %v564 = vsel %vm482, 0.0, %v548
      %v565 = vsel %vm483, 0.0, %v549
      %v566 = vsel %vm484, 0.0, %v550
      %v567 = vpack.c.bf16 %v519, %v519
      %v568 = vpack.c.bf16 %v520, %v520
      %v569 = vpack.c.bf16 %v521, %v521
      %v570 = vpack.c.bf16 %v522, %v522
      %v571 = vpack.c.bf16 %v523, %v523
      %v572 = vpack.c.bf16 %v524, %v524
      %v573 = vpack.c.bf16 %v525, %v525
      %v574 = vpack.c.bf16 %v526, %v526
      %v575 = vpack.c.bf16 %v527, %v527
      %v576 = vpack.c.bf16 %v528, %v528
      %v577 = vpack.c.bf16 %v529, %v529
      %v578 = vpack.c.bf16 %v530, %v530
      %v579 = vpack.c.bf16 %v531, %v531
      %v580 = vpack.c.bf16 %v532, %v532
      %v581 = vpack.c.bf16 %v533, %v533
      %v582 = vpack.c.bf16 %v534, %v534
      %v583 = vpack.c.bf16 %v228, %v228
      %v584 = vpack.c.bf16 %v229, %v229
      %v585 = vpack.c.bf16 %v230, %v230
      %v586 = vpack.c.bf16 %v231, %v231
      %v587 = vpack.c.bf16 %v232, %v232
      %v588 = vpack.c.bf16 %v233, %v233
      %v589 = vpack.c.bf16 %v234, %v234
      %v590 = vpack.c.bf16 %v235, %v235
      %v591 = vpack.c.bf16 %v236, %v236
      %v592 = vpack.c.bf16 %v237, %v237
      %v593 = vpack.c.bf16 %v238, %v238
      %v594 = vpack.c.bf16 %v239, %v239
      %v595 = vpack.c.bf16 %v240, %v240
      %v596 = vpack.c.bf16 %v241, %v241
      %v597 = vpack.c.bf16 %v242, %v242
      %v598 = vpack.c.bf16 %v243, %v243
      %v599 = vpack.c.bf16 %v551, %v551
      %v600 = vpack.c.bf16 %v552, %v552
      %v601 = vpack.c.bf16 %v553, %v553
      %v602 = vpack.c.bf16 %v554, %v554
      %v603 = vpack.c.bf16 %v555, %v555
      %v604 = vpack.c.bf16 %v556, %v556
      %v605 = vpack.c.bf16 %v557, %v557
      %v606 = vpack.c.bf16 %v558, %v558
      %v607 = vpack.c.bf16 %v559, %v559
      %v608 = vpack.c.bf16 %v560, %v560
      %v609 = vpack.c.bf16 %v561, %v561
      %v610 = vpack.c.bf16 %v562, %v562
      %v611 = vpack.c.bf16 %v563, %v563
      %v612 = vpack.c.bf16 %v564, %v564
      %v613 = vpack.c.bf16 %v565, %v565
      %v614 = vpack.c.bf16 %v566, %v566
      %v631 = vunpack.c.l.b16 %v567
      %v632 = vunpack.c.l.b16 %v568
      %v633 = vunpack.c.l.b16 %v569
      %v634 = vunpack.c.l.b16 %v570
      %v635 = vunpack.c.l.b16 %v571
      %v636 = vunpack.c.l.b16 %v572
      %v637 = vunpack.c.l.b16 %v573
      %v638 = vunpack.c.l.b16 %v574
      %v639 = vunpack.c.l.b16 %v575
      %v640 = vunpack.c.l.b16 %v576
      %v641 = vunpack.c.l.b16 %v577
      %v642 = vunpack.c.l.b16 %v578
      %v643 = vunpack.c.l.b16 %v579
      %v644 = vunpack.c.l.b16 %v580
      %v645 = vunpack.c.l.b16 %v581
      %v646 = vunpack.c.l.b16 %v582
      %v647 = vpack.c.b16 %v632, %v631
      %v648 = vpack.c.b16 %v634, %v633
      %v649 = vpack.c.b16 %v636, %v635
      %v650 = vpack.c.b16 %v638, %v637
      %v651 = vpack.c.b16 %v640, %v639
      %v652 = vpack.c.b16 %v642, %v641
      %v653 = vpack.c.b16 %v644, %v643
      %v654 = vpack.c.b16 %v646, %v645
      %v679 = vunpack.c.l.b16 %v583
      %v680 = vunpack.c.l.b16 %v584
      %v681 = vunpack.c.l.b16 %v585
      %v682 = vunpack.c.l.b16 %v586
      %v683 = vunpack.c.l.b16 %v587
      %v684 = vunpack.c.l.b16 %v588
      %v685 = vunpack.c.l.b16 %v589
      %v686 = vunpack.c.l.b16 %v590
      %v687 = vunpack.c.l.b16 %v591
      %v688 = vunpack.c.l.b16 %v592
      %v689 = vunpack.c.l.b16 %v593
      %v690 = vunpack.c.l.b16 %v594
      %v691 = vunpack.c.l.b16 %v595
      %v692 = vunpack.c.l.b16 %v596
      %v693 = vunpack.c.l.b16 %v597
      %v694 = vunpack.c.l.b16 %v598
      %v695 = vpack.c.b16 %v680, %v679
      %v696 = vpack.c.b16 %v682, %v681
      %v697 = vpack.c.b16 %v684, %v683
      %v698 = vpack.c.b16 %v686, %v685
      %v699 = vpack.c.b16 %v688, %v687
      %v700 = vpack.c.b16 %v690, %v689
      %v701 = vpack.c.b16 %v692, %v691
      %v702 = vpack.c.b16 %v694, %v693
      %v727 = vunpack.c.l.b16 %v599
      %v728 = vunpack.c.l.b16 %v600
      %v729 = vunpack.c.l.b16 %v601
      %v730 = vunpack.c.l.b16 %v602
      %v731 = vunpack.c.l.b16 %v603
      %v732 = vunpack.c.l.b16 %v604
      %v733 = vunpack.c.l.b16 %v605
      %v734 = vunpack.c.l.b16 %v606
      %v735 = vunpack.c.l.b16 %v607
      %v736 = vunpack.c.l.b16 %v608
      %v737 = vunpack.c.l.b16 %v609
      %v738 = vunpack.c.l.b16 %v610
      %v739 = vunpack.c.l.b16 %v611
      %v740 = vunpack.c.l.b16 %v612
      %v741 = vunpack.c.l.b16 %v613
      %v742 = vunpack.c.l.b16 %v614
      %v743 = vpack.c.b16 %v728, %v727
      %v744 = vpack.c.b16 %v730, %v729
      %v745 = vpack.c.b16 %v732, %v731
      %v746 = vpack.c.b16 %v734, %v733
      %v747 = vpack.c.b16 %v736, %v735
      %v748 = vpack.c.b16 %v738, %v737
      %v749 = vpack.c.b16 %v740, %v739
      %v750 = vpack.c.b16 %v742, %v741
      %v759 = vld [vmem:[%s1] sm:$0xf]
      %v760 = vld [vmem:[%s1 + $0x4] sm:$0xf]
      %v761 = vld [vmem:[%s1 + $0x8] sm:$0xf]
      %v762 = vld [vmem:[%s1 + $0xc] sm:$0xf]
      %v763 = vld [vmem:[%s1 + $0x10] sm:$0xf]
      %v764 = vld [vmem:[%s1 + $0x14] sm:$0xf]
      %v765 = vld [vmem:[%s1 + $0x18] sm:$0xf]
      %v766 = vld [vmem:[%s1 + $0x1c] sm:$0xf]
      %v767 = vld [vmem:[%s1 + $0x20] sm:$0xf]
      %v768 = vld [vmem:[%s1 + $0x24] sm:$0xf]
      %v769 = vld [vmem:[%s1 + $0x28] sm:$0xf]
      %v770 = vld [vmem:[%s1 + $0x2c] sm:$0xf]
      %v771 = vld [vmem:[%s1 + $0x30] sm:$0xf]
      %v772 = vld [vmem:[%s1 + $0x34] sm:$0xf]
      %v773 = vld [vmem:[%s1 + $0x38] sm:$0xf]
      %v774 = vld [vmem:[%s1 + $0x3c] sm:$0xf]
      %v775 = vld [vmem:[%s1 + $0x40] sm:$0xf]
      %v776 = vld [vmem:[%s1 + $0x44] sm:$0xf]
      %v777 = vld [vmem:[%s1 + $0x48] sm:$0xf]
      %v778 = vld [vmem:[%s1 + $0x4c] sm:$0xf]
      %v779 = vld [vmem:[%s1 + $0x50] sm:$0xf]
      %v780 = vld [vmem:[%s1 + $0x54] sm:$0xf]
      %v781 = vld [vmem:[%s1 + $0x58] sm:$0xf]
      %v782 = vld [vmem:[%s1 + $0x5c] sm:$0xf]
      %v783 = vld [vmem:[%s1 + $0x60] sm:$0xf]
      %v784 = vld [vmem:[%s1 + $0x64] sm:$0xf]
      %v785 = vld [vmem:[%s1 + $0x68] sm:$0xf]
      %v786 = vld [vmem:[%s1 + $0x6c] sm:$0xf]
      %v787 = vld [vmem:[%s1 + $0x70] sm:$0xf]
      %v788 = vld [vmem:[%s1 + $0x74] sm:$0xf]
      %v789 = vld [vmem:[%s1 + $0x78] sm:$0xf]
      %v790 = vld [vmem:[%s1 + $0x7c] sm:$0xf]
      %v791 = vld [vmem:[%s1 + $0x80] sm:$0xf]
      %v792 = vld [vmem:[%s1 + $0x84] sm:$0xf]
      %v793 = vld [vmem:[%s1 + $0x88] sm:$0xf]
      %v794 = vld [vmem:[%s1 + $0x8c] sm:$0xf]
      %v795 = vld [vmem:[%s1 + $0x90] sm:$0xf]
      %v796 = vld [vmem:[%s1 + $0x94] sm:$0xf]
      %v797 = vld [vmem:[%s1 + $0x98] sm:$0xf]
      %v798 = vld [vmem:[%s1 + $0x9c] sm:$0xf]
      %v799 = vld [vmem:[%s1 + $0xa0] sm:$0xf]
      %v800 = vld [vmem:[%s1 + $0xa4] sm:$0xf]
      %v801 = vld [vmem:[%s1 + $0xa8] sm:$0xf]
      %v802 = vld [vmem:[%s1 + $0xac] sm:$0xf]
      %v803 = vld [vmem:[%s1 + $0xb0] sm:$0xf]
      %v804 = vld [vmem:[%s1 + $0xb4] sm:$0xf]
      %v805 = vld [vmem:[%s1 + $0xb8] sm:$0xf]
      %v806 = vld [vmem:[%s1 + $0xbc] sm:$0xf]
      %v807 = vld [vmem:[%s2] sm:$0x1]
      %v809 = vperm.slane %v807, 0
      %v859 = vunpack.c.l.b16 %v759
      %v860 = vunpack.c.l.b16 %v760
      %v861 = vunpack.c.l.b16 %v761
      %v862 = vunpack.c.l.b16 %v762
      %v863 = vunpack.c.l.b16 %v763
      %v864 = vunpack.c.l.b16 %v764
      %v865 = vunpack.c.l.b16 %v765
      %v866 = vunpack.c.l.b16 %v766
      %v867 = vunpack.c.l.b16 %v767
      %v868 = vunpack.c.l.b16 %v768
      %v869 = vunpack.c.l.b16 %v769
      %v870 = vunpack.c.l.b16 %v770
      %v871 = vunpack.c.l.b16 %v771
      %v872 = vunpack.c.l.b16 %v772
      %v873 = vunpack.c.l.b16 %v773
      %v874 = vunpack.c.l.b16 %v774
      %v875 = vunpack.c.l.b16 %v775
      %v876 = vunpack.c.l.b16 %v776
      %v877 = vunpack.c.l.b16 %v777
      %v878 = vunpack.c.l.b16 %v778
      %v879 = vunpack.c.l.b16 %v779
      %v880 = vunpack.c.l.b16 %v780
      %v881 = vunpack.c.l.b16 %v781
      %v882 = vunpack.c.l.b16 %v782
      %v883 = vunpack.c.l.b16 %v783
      %v884 = vunpack.c.l.b16 %v784
      %v885 = vunpack.c.l.b16 %v785
      %v886 = vunpack.c.l.b16 %v786
      %v887 = vunpack.c.l.b16 %v787
      %v888 = vunpack.c.l.b16 %v788
      %v889 = vunpack.c.l.b16 %v789
      %v890 = vunpack.c.l.b16 %v790
      %v891 = vunpack.c.l.b16 %v791
      %v892 = vunpack.c.l.b16 %v792
      %v893 = vunpack.c.l.b16 %v793
      %v894 = vunpack.c.l.b16 %v794
      %v895 = vunpack.c.l.b16 %v795
      %v896 = vunpack.c.l.b16 %v796
      %v897 = vunpack.c.l.b16 %v797
      %v898 = vunpack.c.l.b16 %v798
      %v899 = vunpack.c.l.b16 %v799
      %v900 = vunpack.c.l.b16 %v800
      %v901 = vunpack.c.l.b16 %v801
      %v902 = vunpack.c.l.b16 %v802
      %v903 = vunpack.c.l.b16 %v803
      %v904 = vunpack.c.l.b16 %v804
      %v905 = vunpack.c.l.b16 %v805
      %v906 = vunpack.c.l.b16 %v806
      %v907 = vpack.c.b16 %v860, %v859
      %v908 = vpack.c.b16 %v862, %v861
      %v909 = vpack.c.b16 %v864, %v863
      %v910 = vpack.c.b16 %v866, %v865
      %v911 = vpack.c.b16 %v868, %v867
      %v912 = vpack.c.b16 %v870, %v869
      %v913 = vpack.c.b16 %v872, %v871
      %v914 = vpack.c.b16 %v874, %v873
      %v915 = vpack.c.b16 %v876, %v875
      %v916 = vpack.c.b16 %v878, %v877
      %v917 = vpack.c.b16 %v880, %v879
      %v918 = vpack.c.b16 %v882, %v881
      %v919 = vpack.c.b16 %v884, %v883
      %v920 = vpack.c.b16 %v886, %v885
      %v921 = vpack.c.b16 %v888, %v887
      %v922 = vpack.c.b16 %v890, %v889
      %v923 = vpack.c.b16 %v892, %v891
      %v924 = vpack.c.b16 %v894, %v893
      %v925 = vpack.c.b16 %v896, %v895
      %v926 = vpack.c.b16 %v898, %v897
      %v927 = vpack.c.b16 %v900, %v899
      %v928 = vpack.c.b16 %v902, %v901
      %v929 = vpack.c.b16 %v904, %v903
      %v930 = vpack.c.b16 %v906, %v905
      %955 = vmatpush.bf16.msra.mxu0 %v914
      %956 = vmatpush.bf16.msra.mxu0 %v913
      %957 = vmatpush.bf16.msra.mxu0 %v912
      %958 = vmatpush.bf16.msra.mxu0 %v911
      %959 = vmatpush.bf16.msra.mxu0 %v910
      %960 = vmatpush.bf16.msra.mxu0 %v909
      %961 = vmatpush.bf16.msra.mxu0 %v908
      %962 = vmatpush.bf16.msra.mxu0 %v907
      %963 = vmatmul.bf16.gmra.mxu0 %v647
      %v964 = vpop.f32.mrf.mxu0
      %v965 = vadd.f32 %v809, %v964
      %v966 = vpop.f32.mrf.mxu0
      %v967 = vadd.f32 %v809, %v966
      %968 = vmatmul.bf16.gmra.mxu0 %v648
      %v969 = vpop.f32.mrf.mxu0
      %v970 = vadd.f32 %v809, %v969
      %v971 = vpop.f32.mrf.mxu0
      %v972 = vadd.f32 %v809, %v971
      %973 = vmatmul.bf16.gmra.mxu0 %v649
      %v974 = vpop.f32.mrf.mxu0
      %v975 = vadd.f32 %v809, %v974
      %v976 = vpop.f32.mrf.mxu0
      %v977 = vadd.f32 %v809, %v976
      %978 = vmatmul.bf16.gmra.mxu0 %v650
      %v979 = vpop.f32.mrf.mxu0
      %v980 = vadd.f32 %v809, %v979
      %v981 = vpop.f32.mrf.mxu0
      %v982 = vadd.f32 %v809, %v981
      %983 = vmatmul.bf16.gmra.mxu0 %v651
      %v984 = vpop.f32.mrf.mxu0
      %v985 = vadd.f32 %v809, %v984
      %v986 = vpop.f32.mrf.mxu0
      %v987 = vadd.f32 %v809, %v986
      %988 = vmatmul.bf16.gmra.mxu0 %v652
      %v989 = vpop.f32.mrf.mxu0
      %v990 = vadd.f32 %v809, %v989
      %v991 = vpop.f32.mrf.mxu0
      %v992 = vadd.f32 %v809, %v991
      %993 = vmatmul.bf16.gmra.mxu0 %v653
      %v994 = vpop.f32.mrf.mxu0
      %v995 = vadd.f32 %v809, %v994
      %v996 = vpop.f32.mrf.mxu0
      %v997 = vadd.f32 %v809, %v996
      %998 = vmatmul.bf16.gmra.mxu0 %v654
      %v999 = vpop.f32.mrf.mxu0
      %v1000 = vadd.f32 %v809, %v999
      %v1001 = vpop.f32.mrf.mxu0
      %v1002 = vadd.f32 %v809, %v1001
      %1003 = vdwg.mxu0
      %1004 = vmatpush.bf16.msra.mxu0 %v922
      %1005 = vmatpush.bf16.msra.mxu0 %v921
      %1006 = vmatpush.bf16.msra.mxu0 %v920
      %1007 = vmatpush.bf16.msra.mxu0 %v919
      %1008 = vmatpush.bf16.msra.mxu0 %v918
      %1009 = vmatpush.bf16.msra.mxu0 %v917
      %1010 = vmatpush.bf16.msra.mxu0 %v916
      %1011 = vmatpush.bf16.msra.mxu0 %v915
      %1012 = vmatmul.bf16.gmra.mxu0 %v695
      %v1013 = vpop.f32.mrf.mxu0
      %v1014 = vadd.f32 %v965, %v1013
      %v1015 = vpop.f32.mrf.mxu0
      %v1016 = vadd.f32 %v967, %v1015
      %1017 = vmatmul.bf16.gmra.mxu0 %v696
      %v1018 = vpop.f32.mrf.mxu0
      %v1019 = vadd.f32 %v970, %v1018
      %v1020 = vpop.f32.mrf.mxu0
      %v1021 = vadd.f32 %v972, %v1020
      %1022 = vmatmul.bf16.gmra.mxu0 %v697
      %v1023 = vpop.f32.mrf.mxu0
      %v1024 = vadd.f32 %v975, %v1023
      %v1025 = vpop.f32.mrf.mxu0
      %v1026 = vadd.f32 %v977, %v1025
      %1027 = vmatmul.bf16.gmra.mxu0 %v698
      %v1028 = vpop.f32.mrf.mxu0
      %v1029 = vadd.f32 %v980, %v1028
      %v1030 = vpop.f32.mrf.mxu0
      %v1031 = vadd.f32 %v982, %v1030
      %1032 = vmatmul.bf16.gmra.mxu0 %v699
      %v1033 = vpop.f32.mrf.mxu0
      %v1034 = vadd.f32 %v985, %v1033
      %v1035 = vpop.f32.mrf.mxu0
      %v1036 = vadd.f32 %v987, %v1035
      %1037 = vmatmul.bf16.gmra.mxu0 %v700
      %v1038 = vpop.f32.mrf.mxu0
      %v1039 = vadd.f32 %v990, %v1038
      %v1040 = vpop.f32.mrf.mxu0
      %v1041 = vadd.f32 %v992, %v1040
      %1042 = vmatmul.bf16.gmra.mxu0 %v701
      %v1043 = vpop.f32.mrf.mxu0
      %v1044 = vadd.f32 %v995, %v1043
      %v1045 = vpop.f32.mrf.mxu0
      %v1046 = vadd.f32 %v997, %v1045
      %1047 = vmatmul.bf16.gmra.mxu0 %v702
      %v1048 = vpop.f32.mrf.mxu0
      %v1049 = vadd.f32 %v1000, %v1048
      %v1050 = vpop.f32.mrf.mxu0
      %v1051 = vadd.f32 %v1002, %v1050
      %1052 = vdwg.mxu0
      %1053 = vmatpush.bf16.msra.mxu0 %v930
      %1054 = vmatpush.bf16.msra.mxu0 %v929
      %1055 = vmatpush.bf16.msra.mxu0 %v928
      %1056 = vmatpush.bf16.msra.mxu0 %v927
      %1057 = vmatpush.bf16.msra.mxu0 %v926
      %1058 = vmatpush.bf16.msra.mxu0 %v925
      %1059 = vmatpush.bf16.msra.mxu0 %v924
      %1060 = vmatpush.bf16.msra.mxu0 %v923
      %1061 = vmatmul.bf16.gmra.mxu0 %v743
      %v1062 = vpop.f32.mrf.mxu0
      %v1063 = vadd.f32 %v1014, %v1062
      %v1064 = vpop.f32.mrf.mxu0
      %v1065 = vadd.f32 %v1016, %v1064
      %1066 = vmatmul.bf16.gmra.mxu0 %v744
      %v1067 = vpop.f32.mrf.mxu0
      %v1068 = vadd.f32 %v1019, %v1067
      %v1069 = vpop.f32.mrf.mxu0
      %v1070 = vadd.f32 %v1021, %v1069
      %1071 = vmatmul.bf16.gmra.mxu0 %v745
      %v1072 = vpop.f32.mrf.mxu0
      %v1073 = vadd.f32 %v1024, %v1072
      %v1074 = vpop.f32.mrf.mxu0
      %v1075 = vadd.f32 %v1026, %v1074
      %1076 = vmatmul.bf16.gmra.mxu0 %v746
      %v1077 = vpop.f32.mrf.mxu0
      %v1078 = vadd.f32 %v1029, %v1077
      %v1079 = vpop.f32.mrf.mxu0
      %v1080 = vadd.f32 %v1031, %v1079
      %1081 = vmatmul.bf16.gmra.mxu0 %v747
      %v1082 = vpop.f32.mrf.mxu0
      %v1083 = vadd.f32 %v1034, %v1082
      %v1084 = vpop.f32.mrf.mxu0
      %v1085 = vadd.f32 %v1036, %v1084
      %1086 = vmatmul.bf16.gmra.mxu0 %v748
      %v1087 = vpop.f32.mrf.mxu0
      %v1088 = vadd.f32 %v1039, %v1087
      %v1089 = vpop.f32.mrf.mxu0
      %v1090 = vadd.f32 %v1041, %v1089
      %1091 = vmatmul.bf16.gmra.mxu0 %v749
      %v1092 = vpop.f32.mrf.mxu0
      %v1093 = vadd.f32 %v1044, %v1092
      %v1094 = vpop.f32.mrf.mxu0
      %v1095 = vadd.f32 %v1046, %v1094
      %1096 = vmatmul.bf16.gmra.mxu0 %v750
      %v1097 = vpop.f32.mrf.mxu0
      %v1098 = vadd.f32 %v1049, %v1097
      %v1099 = vpop.f32.mrf.mxu0
      %v1100 = vadd.f32 %v1051, %v1099
      %1101 = vdwg.mxu0
      %v1102 = vmax.f32 %v1063, 0.0
      %v1103 = vmax.f32 %v1065, 0.0
      %v1104 = vmax.f32 %v1068, 0.0
      %v1105 = vmax.f32 %v1070, 0.0
      %v1106 = vmax.f32 %v1073, 0.0
      %v1107 = vmax.f32 %v1075, 0.0
      %v1108 = vmax.f32 %v1078, 0.0
      %v1109 = vmax.f32 %v1080, 0.0
      %v1110 = vmax.f32 %v1083, 0.0
      %v1111 = vmax.f32 %v1085, 0.0
      %v1112 = vmax.f32 %v1088, 0.0
      %v1113 = vmax.f32 %v1090, 0.0
      %v1114 = vmax.f32 %v1093, 0.0
      %v1115 = vmax.f32 %v1095, 0.0
      %v1116 = vmax.f32 %v1098, 0.0
      %v1117 = vmax.f32 %v1100, 0.0
      %1118 = vst [vmem:[#allocation2 + $0x1] sm:$0xff] %v1102
      %1119 = vst [vmem:[#allocation2 + $0x9] sm:$0xff] %v1103
      %1120 = vst [vmem:[#allocation2 + $0x11] sm:$0xff] %v1104
      %1121 = vst [vmem:[#allocation2 + $0x19] sm:$0xff] %v1105
      %1122 = vst [vmem:[#allocation2 + $0x21] sm:$0xff] %v1106
      %1123 = vst [vmem:[#allocation2 + $0x29] sm:$0xff] %v1107
      %1124 = vst [vmem:[#allocation2 + $0x31] sm:$0xff] %v1108
      %1125 = vst [vmem:[#allocation2 + $0x39] sm:$0xff] %v1109
      %1126 = vst [vmem:[#allocation2 + $0x41] sm:$0xff] %v1110
      %1127 = vst [vmem:[#allocation2 + $0x49] sm:$0xff] %v1111
      %1128 = vst [vmem:[#allocation2 + $0x51] sm:$0xff] %v1112
      %1129 = vst [vmem:[#allocation2 + $0x59] sm:$0xff] %v1113
      %1130 = vst [vmem:[#allocation2 + $0x61] sm:$0xff] %v1114
      %1131 = vst [vmem:[#allocation2 + $0x69] sm:$0xff] %v1115
      %1132 = vst [vmem:[#allocation2 + $0x71] sm:$0xff] %v1116
      %1133 = vst [vmem:[#allocation2 + $0x79] sm:$0xff] %v1117
      %v1134 = vld [vmem:[#allocation2] sm:$0xff]
      %v1135 = vld [vmem:[#allocation2 + $0x8] sm:$0xff]
      %v1136 = vld [vmem:[#allocation2 + $0x10] sm:$0xff]
      %v1137 = vld [vmem:[#allocation2 + $0x18] sm:$0xff]
      %v1138 = vld [vmem:[#allocation2 + $0x20] sm:$0xff]
      %v1139 = vld [vmem:[#allocation2 + $0x28] sm:$0xff]
      %v1140 = vld [vmem:[#allocation2 + $0x30] sm:$0xff]
      %v1141 = vld [vmem:[#allocation2 + $0x38] sm:$0xff]
      %v1142 = vld [vmem:[#allocation2 + $0x40] sm:$0xff]
      %v1143 = vld [vmem:[#allocation2 + $0x48] sm:$0xff]
      %v1144 = vld [vmem:[#allocation2 + $0x50] sm:$0xff]
      %v1145 = vld [vmem:[#allocation2 + $0x58] sm:$0xff]
      %v1146 = vld [vmem:[#allocation2 + $0x60] sm:$0xff]
      %v1147 = vld [vmem:[#allocation2 + $0x68] sm:$0xff]
      %v1148 = vld [vmem:[#allocation2 + $0x70] sm:$0xff]
      %v1149 = vld [vmem:[#allocation2 + $0x78] sm:$0xff]
      %v1150 = vsel %vm453, 0.0, %v1134
      %v1151 = vsel %vm454, 0.0, %v1135
      %v1152 = vsel %vm455, 0.0, %v1136
      %v1153 = vsel %vm456, 0.0, %v1137
      %v1154 = vsel %vm457, 0.0, %v1138
      %v1155 = vsel %vm458, 0.0, %v1139
      %v1156 = vsel %vm459, 0.0, %v1140
      %v1157 = vsel %vm460, 0.0, %v1141
      %v1158 = vsel %vm461, 0.0, %v1142
      %v1159 = vsel %vm462, 0.0, %v1143
      %v1160 = vsel %vm463, 0.0, %v1144
      %v1161 = vsel %vm464, 0.0, %v1145
      %v1162 = vsel %vm465, 0.0, %v1146
      %v1163 = vsel %vm466, 0.0, %v1147
      %v1164 = vsel %vm467, 0.0, %v1148
      %v1165 = vsel %vm468, 0.0, %v1149
      %v1166 = vld [vmem:[#allocation2 + $0x2] sm:$0xff]
      %v1167 = vld [vmem:[#allocation2 + $0xa] sm:$0xff]
      %v1168 = vld [vmem:[#allocation2 + $0x12] sm:$0xff]
      %v1169 = vld [vmem:[#allocation2 + $0x1a] sm:$0xff]
      %v1170 = vld [vmem:[#allocation2 + $0x22] sm:$0xff]
      %v1171 = vld [vmem:[#allocation2 + $0x2a] sm:$0xff]
      %v1172 = vld [vmem:[#allocation2 + $0x32] sm:$0xff]
      %v1173 = vld [vmem:[#allocation2 + $0x3a] sm:$0xff]
      %v1174 = vld [vmem:[#allocation2 + $0x42] sm:$0xff]
      %v1175 = vld [vmem:[#allocation2 + $0x4a] sm:$0xff]
      %v1176 = vld [vmem:[#allocation2 + $0x52] sm:$0xff]
      %v1177 = vld [vmem:[#allocation2 + $0x5a] sm:$0xff]
      %v1178 = vld [vmem:[#allocation2 + $0x62] sm:$0xff]
      %v1179 = vld [vmem:[#allocation2 + $0x6a] sm:$0xff]
      %v1180 = vld [vmem:[#allocation2 + $0x72] sm:$0xff]
      %v1181 = vld [vmem:[#allocation2 + $0x7a] sm:$0xff]
      %v1182 = vsel %vm469, 0.0, %v1166
      %v1183 = vsel %vm470, 0.0, %v1167
      %v1184 = vsel %vm471, 0.0, %v1168
      %v1185 = vsel %vm472, 0.0, %v1169
      %v1186 = vsel %vm473, 0.0, %v1170
      %v1187 = vsel %vm474, 0.0, %v1171
      %v1188 = vsel %vm475, 0.0, %v1172
      %v1189 = vsel %vm476, 0.0, %v1173
      %v1190 = vsel %vm477, 0.0, %v1174
      %v1191 = vsel %vm478, 0.0, %v1175
      %v1192 = vsel %vm479, 0.0, %v1176
      %v1193 = vsel %vm480, 0.0, %v1177
      %v1194 = vsel %vm481, 0.0, %v1178
      %v1195 = vsel %vm482, 0.0, %v1179
      %v1196 = vsel %vm483, 0.0, %v1180
      %v1197 = vsel %vm484, 0.0, %v1181
      %v1198 = vpack.c.bf16 %v1150, %v1150
      %v1199 = vpack.c.bf16 %v1151, %v1151
      %v1200 = vpack.c.bf16 %v1152, %v1152
      %v1201 = vpack.c.bf16 %v1153, %v1153
      %v1202 = vpack.c.bf16 %v1154, %v1154
      %v1203 = vpack.c.bf16 %v1155, %v1155
      %v1204 = vpack.c.bf16 %v1156, %v1156
      %v1205 = vpack.c.bf16 %v1157, %v1157
      %v1206 = vpack.c.bf16 %v1158, %v1158
      %v1207 = vpack.c.bf16 %v1159, %v1159
      %v1208 = vpack.c.bf16 %v1160, %v1160
      %v1209 = vpack.c.bf16 %v1161, %v1161
      %v1210 = vpack.c.bf16 %v1162, %v1162
      %v1211 = vpack.c.bf16 %v1163, %v1163
      %v1212 = vpack.c.bf16 %v1164, %v1164
      %v1213 = vpack.c.bf16 %v1165, %v1165
      %v1214 = vpack.c.bf16 %v1102, %v1102
      %v1215 = vpack.c.bf16 %v1103, %v1103
      %v1216 = vpack.c.bf16 %v1104, %v1104
      %v1217 = vpack.c.bf16 %v1105, %v1105
      %v1218 = vpack.c.bf16 %v1106, %v1106
      %v1219 = vpack.c.bf16 %v1107, %v1107
      %v1220 = vpack.c.bf16 %v1108, %v1108
      %v1221 = vpack.c.bf16 %v1109, %v1109
      %v1222 = vpack.c.bf16 %v1110, %v1110
      %v1223 = vpack.c.bf16 %v1111, %v1111
      %v1224 = vpack.c.bf16 %v1112, %v1112
      %v1225 = vpack.c.bf16 %v1113, %v1113
      %v1226 = vpack.c.bf16 %v1114, %v1114
      %v1227 = vpack.c.bf16 %v1115, %v1115
      %v1228 = vpack.c.bf16 %v1116, %v1116
      %v1229 = vpack.c.bf16 %v1117, %v1117
      %v1230 = vpack.c.bf16 %v1182, %v1182
      %v1231 = vpack.c.bf16 %v1183, %v1183
      %v1232 = vpack.c.bf16 %v1184, %v1184
      %v1233 = vpack.c.bf16 %v1185, %v1185
      %v1234 = vpack.c.bf16 %v1186, %v1186
      %v1235 = vpack.c.bf16 %v1187, %v1187
      %v1236 = vpack.c.bf16 %v1188, %v1188
      %v1237 = vpack.c.bf16 %v1189, %v1189
      %v1238 = vpack.c.bf16 %v1190, %v1190
      %v1239 = vpack.c.bf16 %v1191, %v1191
      %v1240 = vpack.c.bf16 %v1192, %v1192
      %v1241 = vpack.c.bf16 %v1193, %v1193
      %v1242 = vpack.c.bf16 %v1194, %v1194
      %v1243 = vpack.c.bf16 %v1195, %v1195
      %v1244 = vpack.c.bf16 %v1196, %v1196
      %v1245 = vpack.c.bf16 %v1197, %v1197
      %v1262 = vunpack.c.l.b16 %v1198
      %v1263 = vunpack.c.l.b16 %v1199
      %v1264 = vunpack.c.l.b16 %v1200
      %v1265 = vunpack.c.l.b16 %v1201
      %v1266 = vunpack.c.l.b16 %v1202
      %v1267 = vunpack.c.l.b16 %v1203
      %v1268 = vunpack.c.l.b16 %v1204
      %v1269 = vunpack.c.l.b16 %v1205
      %v1270 = vunpack.c.l.b16 %v1206
      %v1271 = vunpack.c.l.b16 %v1207
      %v1272 = vunpack.c.l.b16 %v1208
      %v1273 = vunpack.c.l.b16 %v1209
      %v1274 = vunpack.c.l.b16 %v1210
      %v1275 = vunpack.c.l.b16 %v1211
      %v1276 = vunpack.c.l.b16 %v1212
      %v1277 = vunpack.c.l.b16 %v1213
      %v1278 = vpack.c.b16 %v1263, %v1262
      %v1279 = vpack.c.b16 %v1265, %v1264
      %v1280 = vpack.c.b16 %v1267, %v1266
      %v1281 = vpack.c.b16 %v1269, %v1268
      %v1282 = vpack.c.b16 %v1271, %v1270
      %v1283 = vpack.c.b16 %v1273, %v1272
      %v1284 = vpack.c.b16 %v1275, %v1274
      %v1285 = vpack.c.b16 %v1277, %v1276
      %v1310 = vunpack.c.l.b16 %v1214
      %v1311 = vunpack.c.l.b16 %v1215
      %v1312 = vunpack.c.l.b16 %v1216
      %v1313 = vunpack.c.l.b16 %v1217
      %v1314 = vunpack.c.l.b16 %v1218
      %v1315 = vunpack.c.l.b16 %v1219
      %v1316 = vunpack.c.l.b16 %v1220
      %v1317 = vunpack.c.l.b16 %v1221
      %v1318 = vunpack.c.l.b16 %v1222
      %v1319 = vunpack.c.l.b16 %v1223
      %v1320 = vunpack.c.l.b16 %v1224
      %v1321 = vunpack.c.l.b16 %v1225
      %v1322 = vunpack.c.l.b16 %v1226
      %v1323 = vunpack.c.l.b16 %v1227
      %v1324 = vunpack.c.l.b16 %v1228
      %v1325 = vunpack.c.l.b16 %v1229
      %v1326 = vpack.c.b16 %v1311, %v1310
      %v1327 = vpack.c.b16 %v1313, %v1312
      %v1328 = vpack.c.b16 %v1315, %v1314
      %v1329 = vpack.c.b16 %v1317, %v1316
      %v1330 = vpack.c.b16 %v1319, %v1318
      %v1331 = vpack.c.b16 %v1321, %v1320
      %v1332 = vpack.c.b16 %v1323, %v1322
      %v1333 = vpack.c.b16 %v1325, %v1324
      %v1358 = vunpack.c.l.b16 %v1230
      %v1359 = vunpack.c.l.b16 %v1231
      %v1360 = vunpack.c.l.b16 %v1232
      %v1361 = vunpack.c.l.b16 %v1233
      %v1362 = vunpack.c.l.b16 %v1234
      %v1363 = vunpack.c.l.b16 %v1235
      %v1364 = vunpack.c.l.b16 %v1236
      %v1365 = vunpack.c.l.b16 %v1237
      %v1366 = vunpack.c.l.b16 %v1238
      %v1367 = vunpack.c.l.b16 %v1239
      %v1368 = vunpack.c.l.b16 %v1240
      %v1369 = vunpack.c.l.b16 %v1241
      %v1370 = vunpack.c.l.b16 %v1242
      %v1371 = vunpack.c.l.b16 %v1243
      %v1372 = vunpack.c.l.b16 %v1244
      %v1373 = vunpack.c.l.b16 %v1245
      %v1374 = vpack.c.b16 %v1359, %v1358
      %v1375 = vpack.c.b16 %v1361, %v1360
      %v1376 = vpack.c.b16 %v1363, %v1362
      %v1377 = vpack.c.b16 %v1365, %v1364
      %v1378 = vpack.c.b16 %v1367, %v1366
      %v1379 = vpack.c.b16 %v1369, %v1368
      %v1380 = vpack.c.b16 %v1371, %v1370
      %v1381 = vpack.c.b16 %v1373, %v1372
      %v1390 = vld [vmem:[%s3] sm:$0xf]
      %v1391 = vld [vmem:[%s3 + $0x4] sm:$0xf]
      %v1392 = vld [vmem:[%s3 + $0x8] sm:$0xf]
      %v1393 = vld [vmem:[%s3 + $0xc] sm:$0xf]
      %v1394 = vld [vmem:[%s3 + $0x10] sm:$0xf]
      %v1395 = vld [vmem:[%s3 + $0x14] sm:$0xf]
      %v1396 = vld [vmem:[%s3 + $0x18] sm:$0xf]
      %v1397 = vld [vmem:[%s3 + $0x1c] sm:$0xf]
      %v1398 = vld [vmem:[%s3 + $0x20] sm:$0xf]
      %v1399 = vld [vmem:[%s3 + $0x24] sm:$0xf]
      %v1400 = vld [vmem:[%s3 + $0x28] sm:$0xf]
      %v1401 = vld [vmem:[%s3 + $0x2c] sm:$0xf]
      %v1402 = vld [vmem:[%s3 + $0x30] sm:$0xf]
      %v1403 = vld [vmem:[%s3 + $0x34] sm:$0xf]
      %v1404 = vld [vmem:[%s3 + $0x38] sm:$0xf]
      %v1405 = vld [vmem:[%s3 + $0x3c] sm:$0xf]
      %v1406 = vld [vmem:[%s3 + $0x40] sm:$0xf]
      %v1407 = vld [vmem:[%s3 + $0x44] sm:$0xf]
      %v1408 = vld [vmem:[%s3 + $0x48] sm:$0xf]
      %v1409 = vld [vmem:[%s3 + $0x4c] sm:$0xf]
      %v1410 = vld [vmem:[%s3 + $0x50] sm:$0xf]
      %v1411 = vld [vmem:[%s3 + $0x54] sm:$0xf]
      %v1412 = vld [vmem:[%s3 + $0x58] sm:$0xf]
      %v1413 = vld [vmem:[%s3 + $0x5c] sm:$0xf]
      %v1414 = vld [vmem:[%s3 + $0x60] sm:$0xf]
      %v1415 = vld [vmem:[%s3 + $0x64] sm:$0xf]
      %v1416 = vld [vmem:[%s3 + $0x68] sm:$0xf]
      %v1417 = vld [vmem:[%s3 + $0x6c] sm:$0xf]
      %v1418 = vld [vmem:[%s3 + $0x70] sm:$0xf]
      %v1419 = vld [vmem:[%s3 + $0x74] sm:$0xf]
      %v1420 = vld [vmem:[%s3 + $0x78] sm:$0xf]
      %v1421 = vld [vmem:[%s3 + $0x7c] sm:$0xf]
      %v1422 = vld [vmem:[%s3 + $0x80] sm:$0xf]
      %v1423 = vld [vmem:[%s3 + $0x84] sm:$0xf]
      %v1424 = vld [vmem:[%s3 + $0x88] sm:$0xf]
      %v1425 = vld [vmem:[%s3 + $0x8c] sm:$0xf]
      %v1426 = vld [vmem:[%s3 + $0x90] sm:$0xf]
      %v1427 = vld [vmem:[%s3 + $0x94] sm:$0xf]
      %v1428 = vld [vmem:[%s3 + $0x98] sm:$0xf]
      %v1429 = vld [vmem:[%s3 + $0x9c] sm:$0xf]
      %v1430 = vld [vmem:[%s3 + $0xa0] sm:$0xf]
      %v1431 = vld [vmem:[%s3 + $0xa4] sm:$0xf]
      %v1432 = vld [vmem:[%s3 + $0xa8] sm:$0xf]
      %v1433 = vld [vmem:[%s3 + $0xac] sm:$0xf]
      %v1434 = vld [vmem:[%s3 + $0xb0] sm:$0xf]
      %v1435 = vld [vmem:[%s3 + $0xb4] sm:$0xf]
      %v1436 = vld [vmem:[%s3 + $0xb8] sm:$0xf]
      %v1437 = vld [vmem:[%s3 + $0xbc] sm:$0xf]
      %v1438 = vld [vmem:[%s4] sm:$0x1]
      %v1440 = vperm.slane %v1438, 0
      %v1490 = vunpack.c.l.b16 %v1390
      %v1491 = vunpack.c.l.b16 %v1391
      %v1492 = vunpack.c.l.b16 %v1392
      %v1493 = vunpack.c.l.b16 %v1393
      %v1494 = vunpack.c.l.b16 %v1394
      %v1495 = vunpack.c.l.b16 %v1395
      %v1496 = vunpack.c.l.b16 %v1396
      %v1497 = vunpack.c.l.b16 %v1397
      %v1498 = vunpack.c.l.b16 %v1398
      %v1499 = vunpack.c.l.b16 %v1399
      %v1500 = vunpack.c.l.b16 %v1400
      %v1501 = vunpack.c.l.b16 %v1401
      %v1502 = vunpack.c.l.b16 %v1402
      %v1503 = vunpack.c.l.b16 %v1403
      %v1504 = vunpack.c.l.b16 %v1404
      %v1505 = vunpack.c.l.b16 %v1405
      %v1506 = vunpack.c.l.b16 %v1406
      %v1507 = vunpack.c.l.b16 %v1407
      %v1508 = vunpack.c.l.b16 %v1408
      %v1509 = vunpack.c.l.b16 %v1409
      %v1510 = vunpack.c.l.b16 %v1410
      %v1511 = vunpack.c.l.b16 %v1411
      %v1512 = vunpack.c.l.b16 %v1412
      %v1513 = vunpack.c.l.b16 %v1413
      %v1514 = vunpack.c.l.b16 %v1414
      %v1515 = vunpack.c.l.b16 %v1415
      %v1516 = vunpack.c.l.b16 %v1416
      %v1517 = vunpack.c.l.b16 %v1417
      %v1518 = vunpack.c.l.b16 %v1418
      %v1519 = vunpack.c.l.b16 %v1419
      %v1520 = vunpack.c.l.b16 %v1420
      %v1521 = vunpack.c.l.b16 %v1421
      %v1522 = vunpack.c.l.b16 %v1422
      %v1523 = vunpack.c.l.b16 %v1423
      %v1524 = vunpack.c.l.b16 %v1424
      %v1525 = vunpack.c.l.b16 %v1425
      %v1526 = vunpack.c.l.b16 %v1426
      %v1527 = vunpack.c.l.b16 %v1427
      %v1528 = vunpack.c.l.b16 %v1428
      %v1529 = vunpack.c.l.b16 %v1429
      %v1530 = vunpack.c.l.b16 %v1430
      %v1531 = vunpack.c.l.b16 %v1431
      %v1532 = vunpack.c.l.b16 %v1432
      %v1533 = vunpack.c.l.b16 %v1433
      %v1534 = vunpack.c.l.b16 %v1434
      %v1535 = vunpack.c.l.b16 %v1435
      %v1536 = vunpack.c.l.b16 %v1436
      %v1537 = vunpack.c.l.b16 %v1437
      %v1538 = vpack.c.b16 %v1491, %v1490
      %v1539 = vpack.c.b16 %v1493, %v1492
      %v1540 = vpack.c.b16 %v1495, %v1494
      %v1541 = vpack.c.b16 %v1497, %v1496
      %v1542 = vpack.c.b16 %v1499, %v1498
      %v1543 = vpack.c.b16 %v1501, %v1500
      %v1544 = vpack.c.b16 %v1503, %v1502
      %v1545 = vpack.c.b16 %v1505, %v1504
      %v1546 = vpack.c.b16 %v1507, %v1506
      %v1547 = vpack.c.b16 %v1509, %v1508
      %v1548 = vpack.c.b16 %v1511, %v1510
      %v1549 = vpack.c.b16 %v1513, %v1512
      %v1550 = vpack.c.b16 %v1515, %v1514
      %v1551 = vpack.c.b16 %v1517, %v1516
      %v1552 = vpack.c.b16 %v1519, %v1518
      %v1553 = vpack.c.b16 %v1521, %v1520
      %v1554 = vpack.c.b16 %v1523, %v1522
      %v1555 = vpack.c.b16 %v1525, %v1524
      %v1556 = vpack.c.b16 %v1527, %v1526
      %v1557 = vpack.c.b16 %v1529, %v1528
      %v1558 = vpack.c.b16 %v1531, %v1530
      %v1559 = vpack.c.b16 %v1533, %v1532
      %v1560 = vpack.c.b16 %v1535, %v1534
      %v1561 = vpack.c.b16 %v1537, %v1536
      %1586 = vmatpush.bf16.msra.mxu0 %v1545
      %1587 = vmatpush.bf16.msra.mxu0 %v1544
      %1588 = vmatpush.bf16.msra.mxu0 %v1543
      %1589 = vmatpush.bf16.msra.mxu0 %v1542
      %1590 = vmatpush.bf16.msra.mxu0 %v1541
      %1591 = vmatpush.bf16.msra.mxu0 %v1540
      %1592 = vmatpush.bf16.msra.mxu0 %v1539
      %1593 = vmatpush.bf16.msra.mxu0 %v1538
      %1594 = vmatmul.bf16.gmra.mxu0 %v1278
      %v1595 = vpop.f32.mrf.mxu0
      %v1596 = vadd.f32 %v1440, %v1595
      %v1597 = vpop.f32.mrf.mxu0
      %v1598 = vadd.f32 %v1440, %v1597
      %1599 = vmatmul.bf16.gmra.mxu0 %v1279
      %v1600 = vpop.f32.mrf.mxu0
      %v1601 = vadd.f32 %v1440, %v1600
      %v1602 = vpop.f32.mrf.mxu0
      %v1603 = vadd.f32 %v1440, %v1602
      %1604 = vmatmul.bf16.gmra.mxu0 %v1280
      %v1605 = vpop.f32.mrf.mxu0
      %v1606 = vadd.f32 %v1440, %v1605
      %v1607 = vpop.f32.mrf.mxu0
      %v1608 = vadd.f32 %v1440, %v1607
      %1609 = vmatmul.bf16.gmra.mxu0 %v1281
      %v1610 = vpop.f32.mrf.mxu0
      %v1611 = vadd.f32 %v1440, %v1610
      %v1612 = vpop.f32.mrf.mxu0
      %v1613 = vadd.f32 %v1440, %v1612
      %1614 = vmatmul.bf16.gmra.mxu0 %v1282
      %v1615 = vpop.f32.mrf.mxu0
      %v1616 = vadd.f32 %v1440, %v1615
      %v1617 = vpop.f32.mrf.mxu0
      %v1618 = vadd.f32 %v1440, %v1617
      %1619 = vmatmul.bf16.gmra.mxu0 %v1283
      %v1620 = vpop.f32.mrf.mxu0
      %v1621 = vadd.f32 %v1440, %v1620
      %v1622 = vpop.f32.mrf.mxu0
      %v1623 = vadd.f32 %v1440, %v1622
      %1624 = vmatmul.bf16.gmra.mxu0 %v1284
      %v1625 = vpop.f32.mrf.mxu0
      %v1626 = vadd.f32 %v1440, %v1625
      %v1627 = vpop.f32.mrf.mxu0
      %v1628 = vadd.f32 %v1440, %v1627
      %1629 = vmatmul.bf16.gmra.mxu0 %v1285
      %v1630 = vpop.f32.mrf.mxu0
      %v1631 = vadd.f32 %v1440, %v1630
      %v1632 = vpop.f32.mrf.mxu0
      %v1633 = vadd.f32 %v1440, %v1632
      %1634 = vdwg.mxu0
      %1635 = vmatpush.bf16.msra.mxu0 %v1553
      %1636 = vmatpush.bf16.msra.mxu0 %v1552
      %1637 = vmatpush.bf16.msra.mxu0 %v1551
      %1638 = vmatpush.bf16.msra.mxu0 %v1550
      %1639 = vmatpush.bf16.msra.mxu0 %v1549
      %1640 = vmatpush.bf16.msra.mxu0 %v1548
      %1641 = vmatpush.bf16.msra.mxu0 %v1547
      %1642 = vmatpush.bf16.msra.mxu0 %v1546
      %1643 = vmatmul.bf16.gmra.mxu0 %v1326
      %v1644 = vpop.f32.mrf.mxu0
      %v1645 = vadd.f32 %v1596, %v1644
      %v1646 = vpop.f32.mrf.mxu0
      %v1647 = vadd.f32 %v1598, %v1646
      %1648 = vmatmul.bf16.gmra.mxu0 %v1327
      %v1649 = vpop.f32.mrf.mxu0
      %v1650 = vadd.f32 %v1601, %v1649
      %v1651 = vpop.f32.mrf.mxu0
      %v1652 = vadd.f32 %v1603, %v1651
      %1653 = vmatmul.bf16.gmra.mxu0 %v1328
      %v1654 = vpop.f32.mrf.mxu0
      %v1655 = vadd.f32 %v1606, %v1654
      %v1656 = vpop.f32.mrf.mxu0
      %v1657 = vadd.f32 %v1608, %v1656
      %1658 = vmatmul.bf16.gmra.mxu0 %v1329
      %v1659 = vpop.f32.mrf.mxu0
      %v1660 = vadd.f32 %v1611, %v1659
      %v1661 = vpop.f32.mrf.mxu0
      %v1662 = vadd.f32 %v1613, %v1661
      %1663 = vmatmul.bf16.gmra.mxu0 %v1330
      %v1664 = vpop.f32.mrf.mxu0
      %v1665 = vadd.f32 %v1616, %v1664
      %v1666 = vpop.f32.mrf.mxu0
      %v1667 = vadd.f32 %v1618, %v1666
      %1668 = vmatmul.bf16.gmra.mxu0 %v1331
      %v1669 = vpop.f32.mrf.mxu0
      %v1670 = vadd.f32 %v1621, %v1669
      %v1671 = vpop.f32.mrf.mxu0
      %v1672 = vadd.f32 %v1623, %v1671
      %1673 = vmatmul.bf16.gmra.mxu0 %v1332
      %v1674 = vpop.f32.mrf.mxu0
      %v1675 = vadd.f32 %v1626, %v1674
      %v1676 = vpop.f32.mrf.mxu0
      %v1677 = vadd.f32 %v1628, %v1676
      %1678 = vmatmul.bf16.gmra.mxu0 %v1333
      %v1679 = vpop.f32.mrf.mxu0
      %v1680 = vadd.f32 %v1631, %v1679
      %v1681 = vpop.f32.mrf.mxu0
      %v1682 = vadd.f32 %v1633, %v1681
      %1683 = vdwg.mxu0
      %1684 = vmatpush.bf16.msra.mxu0 %v1561
      %1685 = vmatpush.bf16.msra.mxu0 %v1560
      %1686 = vmatpush.bf16.msra.mxu0 %v1559
      %1687 = vmatpush.bf16.msra.mxu0 %v1558
      %1688 = vmatpush.bf16.msra.mxu0 %v1557
      %1689 = vmatpush.bf16.msra.mxu0 %v1556
      %1690 = vmatpush.bf16.msra.mxu0 %v1555
      %1691 = vmatpush.bf16.msra.mxu0 %v1554
      %1692 = vmatmul.bf16.gmra.mxu0 %v1374
      %v1693 = vpop.f32.mrf.mxu0
      %v1694 = vadd.f32 %v1645, %v1693
      %v1695 = vpop.f32.mrf.mxu0
      %v1696 = vadd.f32 %v1647, %v1695
      %1697 = vmatmul.bf16.gmra.mxu0 %v1375
      %v1698 = vpop.f32.mrf.mxu0
      %v1699 = vadd.f32 %v1650, %v1698
      %v1700 = vpop.f32.mrf.mxu0
      %v1701 = vadd.f32 %v1652, %v1700
      %1702 = vmatmul.bf16.gmra.mxu0 %v1376
      %v1703 = vpop.f32.mrf.mxu0
      %v1704 = vadd.f32 %v1655, %v1703
      %v1705 = vpop.f32.mrf.mxu0
      %v1706 = vadd.f32 %v1657, %v1705
      %1707 = vmatmul.bf16.gmra.mxu0 %v1377
      %v1708 = vpop.f32.mrf.mxu0
      %v1709 = vadd.f32 %v1660, %v1708
      %v1710 = vpop.f32.mrf.mxu0
      %v1711 = vadd.f32 %v1662, %v1710
      %1712 = vmatmul.bf16.gmra.mxu0 %v1378
      %v1713 = vpop.f32.mrf.mxu0
      %v1714 = vadd.f32 %v1665, %v1713
      %v1715 = vpop.f32.mrf.mxu0
      %v1716 = vadd.f32 %v1667, %v1715
      %1717 = vmatmul.bf16.gmra.mxu0 %v1379
      %v1718 = vpop.f32.mrf.mxu0
      %v1719 = vadd.f32 %v1670, %v1718
      %v1720 = vpop.f32.mrf.mxu0
      %v1721 = vadd.f32 %v1672, %v1720
      %1722 = vmatmul.bf16.gmra.mxu0 %v1380
      %v1723 = vpop.f32.mrf.mxu0
      %v1724 = vadd.f32 %v1675, %v1723
      %v1725 = vpop.f32.mrf.mxu0
      %v1726 = vadd.f32 %v1677, %v1725
      %1727 = vmatmul.bf16.gmra.mxu0 %v1381
      %v1728 = vpop.f32.mrf.mxu0
      %v1729 = vadd.f32 %v1680, %v1728
      %v1730 = vpop.f32.mrf.mxu0
      %v1731 = vadd.f32 %v1682, %v1730
      %1732 = vdwg.mxu0
      %v1733 = vadd.f32 %v1694, %v228
      %v1734 = vadd.f32 %v1696, %v229
      %v1735 = vadd.f32 %v1699, %v230
      %v1736 = vadd.f32 %v1701, %v231
      %v1737 = vadd.f32 %v1704, %v232
      %v1738 = vadd.f32 %v1706, %v233
      %v1739 = vadd.f32 %v1709, %v234
      %v1740 = vadd.f32 %v1711, %v235
      %v1741 = vadd.f32 %v1714, %v236
      %v1742 = vadd.f32 %v1716, %v237
      %v1743 = vadd.f32 %v1719, %v238
      %v1744 = vadd.f32 %v1721, %v239
      %v1745 = vadd.f32 %v1724, %v240
      %v1746 = vadd.f32 %v1726, %v241
      %v1747 = vadd.f32 %v1729, %v242
      %v1748 = vadd.f32 %v1731, %v243
      %v1749 = vmax.f32 %v1733, 0.0
      %v1750 = vmax.f32 %v1734, 0.0
      %v1751 = vmax.f32 %v1735, 0.0
      %v1752 = vmax.f32 %v1736, 0.0
      %v1753 = vmax.f32 %v1737, 0.0
      %v1754 = vmax.f32 %v1738, 0.0
      %v1755 = vmax.f32 %v1739, 0.0
      %v1756 = vmax.f32 %v1740, 0.0
      %v1757 = vmax.f32 %v1741, 0.0
      %v1758 = vmax.f32 %v1742, 0.0
      %v1759 = vmax.f32 %v1743, 0.0
      %v1760 = vmax.f32 %v1744, 0.0
      %v1761 = vmax.f32 %v1745, 0.0
      %v1762 = vmax.f32 %v1746, 0.0
      %v1763 = vmax.f32 %v1747, 0.0
      %v1764 = vmax.f32 %v1748, 0.0
      %1765 = vst [vmem:[%s226] sm:$0xff] %v1749
      %1766 = vst [vmem:[%s226 + $0x8] sm:$0xff] %v1750
      %1767 = vst [vmem:[%s226 + $0x10] sm:$0xff] %v1751
      %1768 = vst [vmem:[%s226 + $0x18] sm:$0xff] %v1752
      %1769 = vst [vmem:[%s226 + $0x20] sm:$0xff] %v1753
      %1770 = vst [vmem:[%s226 + $0x28] sm:$0xff] %v1754
      %1771 = vst [vmem:[%s226 + $0x30] sm:$0xff] %v1755
      %1772 = vst [vmem:[%s226 + $0x38] sm:$0xff] %v1756
      %1773 = vst [vmem:[%s226 + $0x40] sm:$0xff] %v1757
      %1774 = vst [vmem:[%s226 + $0x48] sm:$0xff] %v1758
      %1775 = vst [vmem:[%s226 + $0x50] sm:$0xff] %v1759
      %1776 = vst [vmem:[%s226 + $0x58] sm:$0xff] %v1760
      %1777 = vst [vmem:[%s226 + $0x60] sm:$0xff] %v1761
      %1778 = vst [vmem:[%s226 + $0x68] sm:$0xff] %v1762
      %1779 = vst [vmem:[%s226 + $0x70] sm:$0xff] %v1763
      %1780 = vst [vmem:[%s226 + $0x78] sm:$0xff] %v1764
      %s1781 = smul.u32 16, %s16
      %p1782 = scmp.lt.s32.totalorder %s1781, 31
      %s1783 = scalar_select %p1782, %s1781, 31
      %s1784 = smul.addr %s1783, 8
      %s1785 = scalar_lea.vmem %s5, %s1784
      // Predicated region
      $region41: #{basic_block_forward.1} parent=39 // pred_check
        %p1786 = pneg %p144
      $region42: #{basic_block_forward.1} parent=39 // pred_check_branch
        %1788 = sbr.rel (%p1786) target = $region44
      $region43: #{basic_block_forward.1} parent=39 // pred_region
        %s1789 = smul.u32 16, %s16
      $region44: #{basic_block_forward.1} parent=39 // pred_fallthru
        _
    $region40: #{basic_block_forward.1} parent=5 // pred_fallthru
      _
    %p1790 = scmp.le.s32.totalorder 2, %s11
    // Predicated region
    $region45: #{basic_block_forward.1} parent=5 // pred_check
      %p1791 = pneg %p1790
    $region46: #{basic_block_forward.1} parent=5 // pred_check_branch
      %1793 = sbr.rel (%p1791) target = $region48
    $region47: #{basic_block_forward.1} parent=5 // pred_region
      %s1794 = ssub.s32 %s11, 2
      // Predicated region
      $region49: #{basic_block_forward.1} parent=47 // pred_check
        %p1795 = pneg %p150
      $region50: #{basic_block_forward.1} parent=47 // pred_check_branch
        %1797 = sbr.rel (%p1795) target = $region52
      $region51: #{basic_block_forward.1} parent=47 // pred_region
        %s1798 = smul.u32 16, %s17
        %p1799 = scmp.lt.s32.totalorder %s1798, 31
        %s1800 = scalar_select %p1799, %s1798, 31
        %s1801 = smul.addr %s1800, 8
        %s1802 = scalar_lea.vmem %s5, %s1801
      $region52: #{basic_block_forward.1} parent=47 // pred_fallthru
        _
    $region48: #{basic_block_forward.1} parent=5 // pred_fallthru
      _
  $region6: #{basic_block_forward.1} parent=0 // loop_footer
    %s15 = sadd.s32 1, %s11
  $region7: #{basic_block_forward.1} parent=0 // loop_footer_branch
    %10 = sbr.rel target = $region3
  $region8: #{basic_block_forward.1} parent=0 // loop_exit
    _

</llo_original>
